<compile_context>
chip_gen: v7x
topology: tpu7x:2x2x1
jax: 0.10.0
libtpu: 0.0.40
codegen_flags: <defaults>
</compile_context>

<pallas_src>
import functools
import math

import numpy as np
import jax
import jax.numpy as jnp
from jax.experimental import pallas as pl
from jax.experimental.pallas import tpu as pltpu


# ----------------------------------------------------------------------------- helpers

def _round_up(x, m):
    return ((x + m - 1) // m) * m


def _vmem_limit_bytes():
    """Generation-aware scoped-VMEM limit (leave headroom; v7x only has 64 MiB/TC)."""
    try:
        cap = int(getattr(pltpu.get_tpu_info(), "vmem_capacity_bytes", 0))
    except Exception:
        cap = 0
    if cap <= 0:
        return 48 * 1024 * 1024            # safe on every generation
    return min((cap * 3) // 4, 100 * 1024 * 1024)


# ----------------------------------------------------------------------------- kernels

def matmul_left_kernel(w_ref, x_ref, o_ref):
    # o = W @ X : bf16 operands, f32 MXU accumulation, bf16 out.
    o_ref[...] = jnp.dot(w_ref[...], x_ref[...],
                         preferred_element_type=jnp.float32).astype(o_ref.dtype)


def matmul_right_bias_kernel(x_ref, u_ref, b_ref, o_ref):
    # o = X @ U + b : bf16 matmul, f32 per-row bias, bf16 out.
    y = jnp.dot(x_ref[...], u_ref[...], preferred_element_type=jnp.float32)
    o_ref[...] = (y + b_ref[...]).astype(o_ref.dtype)


def double_conv_kernel(z_ref, wa_ref, sa_ref, ta_ref, wb_ref, sb_ref, tb_ref,
                       mask_ref, o_ref, slab_a, hbuf, slab_b, *, Wq, Lpad):
    # z_ref : (1, Cin_p, Lp2) bf16  padded-flat concat([x2, up]) (zero-padded image, row-major)
    # wa_ref: (CoutA_p, 9*Cin_p)  bf16 stacked-tap weights of layer A
    # wb_ref: (CoutB, 9*CoutA_p)  bf16 stacked-tap weights of layer B
    # sa/ta/sb/tb: per-channel folded BN scale/shift (f32, column vectors)
    # mask_ref: (1, Lpad) f32  (1 = valid "wide" output column)
    # o_ref : (1, CoutB, Lpad) f32 lane-dense "wide" output (junk cols stripped by wrapper)
    # slab_a/slab_b: stacked-K RHS slabs (bf16 VMEM);  hbuf: padded-flat layer-A output (bf16)
    border = Wq + 1
    cin_p = z_ref.shape[1]
    couta_p = hbuf.shape[0]

    # ---- build layer-A stacked-K RHS: 9 shifted copies of the padded-flat input ----
    zp = z_ref[0]                                            # (Cin_p, Lp2) bf16
    for k in range(9):
        off = (k // 3) * Wq + (k % 3)
        slab_a[k * cin_p:(k + 1) * cin_p, :] = zp[:, off:off + Lpad]

    # ---- layer A: ONE deep-K MXU dot + folded BN + ReLU (+ wide-column mask) ----
    acc = jnp.dot(wa_ref[...], slab_a[...], preferred_element_type=jnp.float32)
    h = jnp.maximum(acc * sa_ref[...] + ta_ref[...], 0.0) * mask_ref[...]

    # ---- place h into padded-flat form; re-zero ONLY the halo borders each step ----
    # (cheap: 2*(Wq+1) columns; not program_id==0-gated so it is megacore-safe)
    hbuf[:, :border] = jnp.zeros((couta_p, border), hbuf.dtype)
    hbuf[:, border + Lpad:] = jnp.zeros(
        (couta_p, hbuf.shape[1] - border - Lpad), hbuf.dtype)
    hbuf[:, border:border + Lpad] = h.astype(hbuf.dtype)

    # ---- build layer-B stacked-K RHS from the VMEM-resident padded h ----
    for k in range(9):
        off = (k // 3) * Wq + (k % 3)
        slab_b[k * couta_p:(k + 1) * couta_p, :] = hbuf[:, off:off + Lpad]

    # ---- layer B: ONE deep-K MXU dot + folded BN + ReLU ----
    acc2 = jnp.dot(wb_ref[...], slab_b[...], preferred_element_type=jnp.float32)
    o_ref[0] = jnp.maximum(acc2 * sb_ref[...] + tb_ref[...], 0.0).astype(o_ref.dtype)


# ----------------------------------------------------------------------------- wrappers

def _mm_left(w, x):
    """(M, K) @ (K, N), bf16 in/out, f32 accumulation, single grid step."""
    M, K = w.shape
    N = x.shape[1]
    return pl.pallas_call(
        matmul_left_kernel,
        out_shape=jax.ShapeDtypeStruct((M, N), jnp.bfloat16),
        grid=(1,),
        in_specs=[pl.BlockSpec((M, K), lambda i: (0, 0)),
                  pl.BlockSpec((K, N), lambda i: (0, 0))],
        out_specs=pl.BlockSpec((M, N), lambda i: (0, 0)),
    )(w, x)


def _mm_right_bias(x, u, b):
    """(M, K) @ (K, N) + per-row bias, bf16 in/out, single grid step."""
    M, K = x.shape
    N = u.shape[1]
    return pl.pallas_call(
        matmul_right_bias_kernel,
        out_shape=jax.ShapeDtypeStruct((M, N), jnp.bfloat16),
        grid=(1,),
        in_specs=[pl.BlockSpec((M, K), lambda i: (0, 0)),
                  pl.BlockSpec((K, N), lambda i: (0, 0)),
                  pl.BlockSpec((M, 1), lambda i: (0, 0))],
        out_specs=pl.BlockSpec((M, N), lambda i: (0, 0)),
    )(x, u, b)


def up_path(x1, p):
    """Conv1x1 (bias deferred) then separable bicubic x2 upsample; bf16 end-to-end,
    batch folded into the lane dim so each matmul is one grid step."""
    B, C, H, W = x1.shape
    O = p["w_up"].shape[0]
    Hp, Wp = 2 * H, 2 * W

    xt = x1.transpose(1, 0, 2, 3).reshape(C, B * H * W).astype(jnp.bfloat16)
    y = _mm_left(p["w_up"], xt)                                   # (O, B*H*W)
    y = y.reshape(O, B, H, W).transpose(2, 1, 0, 3).reshape(H, B * O * W)
    yh = _mm_left(p["UH"], y)                                     # (2H, B*O*W)
    yh = yh.reshape(Hp, B, O, W).transpose(1, 2, 0, 3).reshape(B * O * Hp, W)
    up = _mm_right_bias(yh, p["UWt"], p["b_col"])                 # (B*O*2H, 2W)
    return up.reshape(B, O, Hp, Wp)                               # bf16


def padded_flat(x, total_len):
    """(B, C, Hp, Wp) -> zero-padded image, row-major flattened, zero tail to total_len."""
    B, C, Hp, Wp = x.shape
    xp = jnp.pad(x, ((0, 0), (0, 0), (1, 1), (1, 1)))
    xf = xp.reshape(B, C, (Hp + 2) * (Wp + 2))
    return jnp.pad(xf, ((0, 0), (0, 0), (0, total_len - xf.shape[-1])))


def wide_col_mask(Hp, Wp, Lpad):
    Wq = Wp + 2
    L = Hp * Wq
    idx = np.arange(Lpad)
    m = ((idx < L) & (idx % Wq < Wp)).astype(np.float32)
    return jnp.asarray(m).reshape(1, Lpad)


def double_conv_fused(z, p, Hp, Wp):
    """Fused [Conv3x3-BN-ReLU] x 2 on z = cat([x2, up]); intermediate never touches HBM."""
    B, Cin = z.shape[0], z.shape[1]
    Wq = Wp + 2
    L = Hp * Wq
    Lpad = _round_up(L, 128)             # lane-dense output -> unmasked stores
    border = Wq + 1
    Lp2 = 2 * border + Lpad              # padded-flat length covering every tap window

    wa, wb = p["wA_st"], p["wB_st"]
    CoutA_p = wa.shape[0]
    Cin_p = wa.shape[1] // 9
    CoutB = wb.shape[0]

    zc = jnp.pad(z, ((0, 0), (0, Cin_p - Cin), (0, 0), (0, 0)))   # channel pad to 16-mult
    pf = padded_flat(zc, Lp2)                                     # (B, Cin_p, Lp2) bf16
    mask = wide_col_mask(Hp, Wp, Lpad)

    kernel = functools.partial(double_conv_kernel, Wq=Wq, Lpad=Lpad)
    out_wide = pl.pallas_call(
        kernel,
        out_shape=jax.ShapeDtypeStruct((B, CoutB, Lpad), jnp.float32),
        grid=(B,),
        in_specs=[pl.BlockSpec((1, Cin_p, Lp2), lambda b: (b, 0, 0)),
                  pl.BlockSpec((CoutA_p, 9 * Cin_p), lambda b: (0, 0)),
                  pl.BlockSpec((CoutA_p, 1), lambda b: (0, 0)),
                  pl.BlockSpec((CoutA_p, 1), lambda b: (0, 0)),
                  pl.BlockSpec((CoutB, 9 * CoutA_p), lambda b: (0, 0)),
                  pl.BlockSpec((CoutB, 1), lambda b: (0, 0)),
                  pl.BlockSpec((CoutB, 1), lambda b: (0, 0)),
                  pl.BlockSpec((1, Lpad), lambda b: (0, 0))],
        out_specs=pl.BlockSpec((1, CoutB, Lpad), lambda b: (b, 0, 0)),
        scratch_shapes=[pltpu.VMEM((9 * Cin_p, Lpad), jnp.bfloat16),
                        pltpu.VMEM((CoutA_p, Lp2), jnp.bfloat16),
                        pltpu.VMEM((9 * CoutA_p, Lpad), jnp.bfloat16)],
        compiler_params=pltpu.CompilerParams(
            dimension_semantics=("parallel",),
            vmem_limit_bytes=_vmem_limit_bytes()),
    )(pf, wa, p["sA"], p["tA"], wb, p["sB"], p["tB"], mask)

    # strip junk columns of the "wide" layout (Hp rows x Wq cols, first Wp valid).
    return out_wide[:, :, :L].reshape(B, CoutB, Hp, Wq)[:, :, :, :Wp]


def up_conv2d_forward(x1, x2, p):
    up = up_path(x1, p)                                           # (B, C/2, 2H, 2W) bf16
    z = jnp.concatenate([x2.astype(jnp.bfloat16), up], axis=1)    # no in-kernel concat needed
    Hp, Wp = z.shape[2], z.shape[3]
    return double_conv_fused(z, p, Hp, Wp)


# ----------------------------------------------------------------------------- parameter prep

def bicubic_upsample_matrix(n):
    """(2n, n) matrix reproducing PyTorch bicubic x2 (align_corners=False, a=-0.75, clamped)."""
    a = -0.75

    def cubic(d):
        d = abs(d)
        if d <= 1.0:
            return (a + 2.0) * d ** 3 - (a + 3.0) * d ** 2 + 1.0
        if d < 2.0:
            return a * d ** 3 - 5.0 * a * d ** 2 + 8.0 * a * d - 4.0 * a
        return 0.0

    m = np.zeros((2 * n, n), dtype=np.float64)
    for o in range(2 * n):
        src = (o + 0.5) / 2.0 - 0.5
        f = int(math.floor(src))
        for k in range(-1, 3):
            idx = f + k
            m[o, min(max(idx, 0), n - 1)] += cubic(src - idx)
    return jnp.asarray(m, dtype=jnp.float32)


def fold_bn(gamma, beta, mean, var, conv_bias, eps=1e-5):
    s = gamma / jnp.sqrt(var + eps)
    t = s * (conv_bias - mean) + beta
    return s.reshape(-1, 1), t.reshape(-1, 1)


def stack_taps(w4, cout_pad, cin_pad):
    """(Cout, Cin, 3, 3) -> (cout_pad, 9*cin_pad) bf16 with column block k = di*3+dj."""
    co, ci = w4.shape[0], w4.shape[1]
    w = jnp.pad(w4, ((0, cout_pad - co), (0, cin_pad - ci), (0, 0), (0, 0)))
    return jnp.transpose(w, (0, 2, 3, 1)).reshape(cout_pad, 9 * cin_pad).astype(jnp.bfloat16)


def pad_rows(v, n):
    return jnp.pad(v, ((0, n - v.shape[0]), (0, 0)))


# ----------------------------------------------------------------------------- reference

def reference(x1, x2, raw):
    """Pure-jnp reference mirroring the kernel's bf16-at-MXU cast points."""
    f32 = jnp.float32

    def bf(a):
        return a.astype(jnp.bfloat16).astype(f32)

    # up path (conv1x1 commutes exactly with the spatial-only bicubic upsample; bias last,
    # matching nn.Sequential(Upsample(bicubic, x2), Conv2d(k=1))).
    y = jnp.einsum("oc,bchw->bohw", bf(raw["w_up"]), bf(x1))
    y = bf(y)
    yh = jnp.einsum("ph,bohw->bopw", bf(raw["UH"]), y)
    yh = bf(yh)
    up = jnp.einsum("bopw,wq->bopq", yh, bf(raw["UWt"])) + raw["b_up"].reshape(1, -1, 1, 1)
    up = bf(up)

    z = jnp.concatenate([bf(x2), up], axis=1)

    def conv_bn_relu(x, w4, s, t):
        Hh, Ww = x.shape[2], x.shape[3]
        xp = jnp.pad(x, ((0, 0), (0, 0), (1, 1), (1, 1)))
        acc = 0.0
        for di in range(3):
            for dj in range(3):
                acc = acc + jnp.einsum("oc,bchw->bohw", bf(w4[:, :, di, dj]),
                                       xp[:, :, di:di + Hh, dj:dj + Ww])
        return jnp.maximum(acc * s.reshape(1, -1, 1, 1) + t.reshape(1, -1, 1, 1), 0.0)

    h = conv_bn_relu(z, raw["wA"], raw["sA"], raw["tA"])
    return conv_bn_relu(bf(h), raw["wB"], raw["sB"], raw["tB"])


# ----------------------------------------------------------------------------- main

if __name__ == "__main__":
    B, C_IN, C_OUT, H, W = 2, 8, 16, 8, 8
    O = C_IN // 2

    key = jax.random.PRNGKey(0)
    ks = jax.random.split(key, 20)

    # Parameters (deterministic, synthetic).
    w_up = 0.2 * jax.random.normal(ks[0], (O, C_IN), jnp.float32)
    b_up = 0.1 * jax.random.normal(ks[1], (O,), jnp.float32)

    wA = 0.2 * jax.random.normal(ks[2], (C_OUT, C_IN, 3, 3), jnp.float32)
    bA = 0.1 * jax.random.normal(ks[3], (C_OUT,), jnp.float32)
    gA = 1.0 + 0.1 * jax.random.normal(ks[4], (C_OUT,), jnp.float32)
    betaA = 0.1 * jax.random.normal(ks[5], (C_OUT,), jnp.float32)
    mA = 0.1 * jax.random.normal(ks[6], (C_OUT,), jnp.float32)
    vA = 1.0 + 0.1 * jax.random.uniform(ks[7], (C_OUT,), jnp.float32)

    wB = 0.2 * jax.random.normal(ks[8], (C_OUT, C_OUT, 3, 3), jnp.float32)
    bB = 0.1 * jax.random.normal(ks[9], (C_OUT,), jnp.float32)
    gB = 1.0 + 0.1 * jax.random.normal(ks[10], (C_OUT,), jnp.float32)
    betaB = 0.1 * jax.random.normal(ks[11], (C_OUT,), jnp.float32)
    mB = 0.1 * jax.random.normal(ks[12], (C_OUT,), jnp.float32)
    vB = 1.0 + 0.1 * jax.random.uniform(ks[13], (C_OUT,), jnp.float32)

    sA, tA = fold_bn(gA, betaA, mA, vA, bA)
    sB, tB = fold_bn(gB, betaB, mB, vB, bB)

    UH = bicubic_upsample_matrix(H)
    UW = bicubic_upsample_matrix(W)

    CIN_A_PAD = _round_up(C_IN, 16)        # bf16 sublane-packing alignment for slab pieces
    COUT_A_PAD = _round_up(C_OUT, 16)

    params = {
        "w_up": w_up.astype(jnp.bfloat16),
        "UH": UH.astype(jnp.bfloat16),
        "UWt": UW.T.astype(jnp.bfloat16),
        "b_col": jnp.broadcast_to(b_up[None, :, None], (B, O, 2 * H)).reshape(-1, 1),
        "wA_st": stack_taps(wA, COUT_A_PAD, CIN_A_PAD),
        "wB_st": stack_taps(wB, C_OUT, COUT_A_PAD),
        "sA": pad_rows(sA, COUT_A_PAD), "tA": pad_rows(tA, COUT_A_PAD),
        "sB": sB, "tB": tB,
    }
    raw = {"w_up": w_up, "b_up": b_up, "UH": UH, "UWt": UW.T,
           "wA": wA, "wB": wB, "sA": sA, "tA": tA, "sB": sB, "tB": tB}

    # Inputs (PyTorch NCHW convention).
    x1 = jax.random.normal(ks[14], (B, C_IN, H, W), jnp.float32)          # low-res decoder input
    x2 = jax.random.normal(ks[15], (B, O, 2 * H, 2 * W), jnp.float32)     # skip connection

    out = jax.jit(up_conv2d_forward)(x1, x2, params)
    out = jax.block_until_ready(out)
    assert out.shape == (B, C_OUT, 2 * H, 2 * W), out.shape

    ref = jax.block_until_ready(reference(x1, x2, raw))
    np.testing.assert_allclose(np.asarray(out), np.asarray(ref), rtol=2e-2, atol=2e-2)

    print("KERNEL_OK")
</pallas_src>

<mosaic_0001>
module attributes {stable_mosaic.version = 11 : i64} {
  func.func @matmul_left_kernel(%arg0: i32, %arg1: memref<4x8xbf16, #tpu.memory_space<vmem>>, %arg2: memref<8x128xbf16, #tpu.memory_space<vmem>>, %arg3: memref<4x128xbf16, #tpu.memory_space<vmem>>) attributes {dimension_semantics = [#tpu.dimension_semantics<arbitrary>], iteration_bounds = array<i64: 1>, scalar_prefetch = 0 : i64, scratch_operands = 0 : i64, tpu.core_type = #tpu.core_type<tc>, window_params = [{pipeline_mode = #tpu.pipeline_mode<synchronous>, transform_indices = @transform_0, window_bounds = array<i64: 4, 8>}, {pipeline_mode = #tpu.pipeline_mode<synchronous>, transform_indices = @transform_1, window_bounds = array<i64: 8, 128>}, {pipeline_mode = #tpu.pipeline_mode<synchronous>, transform_indices = @transform_2, window_bounds = array<i64: 4, 128>}]} {
    %c0 = arith.constant 0 : index
    %c0_0 = arith.constant 0 : index
    %0 = vector.load %arg1[%c0, %c0_0] : memref<4x8xbf16, #tpu.memory_space<vmem>>, vector<4x8xbf16>
    %c0_1 = arith.constant 0 : index
    %c0_2 = arith.constant 0 : index
    %1 = vector.load %arg2[%c0_1, %c0_2] : memref<8x128xbf16, #tpu.memory_space<vmem>>, vector<8x128xbf16>
    %cst = arith.constant dense<0.000000e+00> : vector<4x128xf32>
    %2 = tpu.matmul %0, %1, %cst {dimension_numbers = #tpu.dot_dimension_numbers<[1], [0], [0], [1], [0, 0, 1, 1], [], []>} : vector<4x8xbf16>, vector<8x128xbf16>, vector<4x128xf32> -> vector<4x128xf32>
    %3 = arith.truncf %2 : vector<4x128xf32> to vector<4x128xbf16>
    %c0_3 = arith.constant 0 : index
    %c0_4 = arith.constant 0 : index
    %4 = vector.load %arg3[%c0_3, %c0_4] : memref<4x128xbf16, #tpu.memory_space<vmem>>, vector<4x128xbf16>
    tpu.vector_store %arg3[%c0_3, %c0_4], %3 {strides = array<i32>} : memref<4x128xbf16, #tpu.memory_space<vmem>>, vector<4x128xbf16>,
    return
  }
  func.func @transform_0(%arg0: i32) -> (i32, i32) {
    %c0_i32 = arith.constant 0 : i32
    %c0_i32_0 = arith.constant 0 : i32
    %c0_i32_1 = arith.constant 0 : i32
    return %c0_i32, %c0_i32_0 : i32, i32
  }
  func.func @transform_1(%arg0: i32) -> (i32, i32) {
    %c0_i32 = arith.constant 0 : i32
    %c0_i32_0 = arith.constant 0 : i32
    %c0_i32_1 = arith.constant 0 : i32
    return %c0_i32, %c0_i32_0 : i32, i32
  }
  func.func @transform_2(%arg0: i32) -> (i32, i32) {
    %c0_i32 = arith.constant 0 : i32
    %c0_i32_0 = arith.constant 0 : i32
    %c0_i32_1 = arith.constant 0 : i32
    return %c0_i32, %c0_i32_0 : i32, i32
  }
}

module attributes {stable_mosaic.version = 11 : i64} {
  func.func @matmul_left_kernel(%arg0: i32, %arg1: memref<16x8xbf16, #tpu.memory_space<vmem>>, %arg2: memref<8x64xbf16, #tpu.memory_space<vmem>>, %arg3: memref<16x64xbf16, #tpu.memory_space<vmem>>) attributes {dimension_semantics = [#tpu.dimension_semantics<arbitrary>], iteration_bounds = array<i64: 1>, scalar_prefetch = 0 : i64, scratch_operands = 0 : i64, tpu.core_type = #tpu.core_type<tc>, window_params = [{pipeline_mode = #tpu.pipeline_mode<synchronous>, transform_indices = @transform_0, window_bounds = array<i64: 16, 8>}, {pipeline_mode = #tpu.pipeline_mode<synchronous>, transform_indices = @transform_1, window_bounds = array<i64: 8, 64>}, {pipeline_mode = #tpu.pipeline_mode<synchronous>, transform_indices = @transform_2, window_bounds = array<i64: 16, 64>}]} {
    %c0 = arith.constant 0 : index
    %c0_0 = arith.constant 0 : index
    %0 = vector.load %arg1[%c0, %c0_0] : memref<16x8xbf16, #tpu.memory_space<vmem>>, vector<16x8xbf16>
    %c0_1 = arith.constant 0 : index
    %c0_2 = arith.constant 0 : index
    %1 = vector.load %arg2[%c0_1, %c0_2] : memref<8x64xbf16, #tpu.memory_space<vmem>>, vector<8x64xbf16>
    %cst = arith.constant dense<0.000000e+00> : vector<16x64xf32>
    %2 = tpu.matmul %0, %1, %cst {dimension_numbers = #tpu.dot_dimension_numbers<[1], [0], [0], [1], [0, 0, 1, 1], [], []>} : vector<16x8xbf16>, vector<8x64xbf16>, vector<16x64xf32> -> vector<16x64xf32>
    %3 = arith.truncf %2 : vector<16x64xf32> to vector<16x64xbf16>
    %c0_3 = arith.constant 0 : index
    %c0_4 = arith.constant 0 : index
    %4 = vector.load %arg3[%c0_3, %c0_4] : memref<16x64xbf16, #tpu.memory_space<vmem>>, vector<16x64xbf16>
    tpu.vector_store %arg3[%c0_3, %c0_4], %3 {strides = array<i32>} : memref<16x64xbf16, #tpu.memory_space<vmem>>, vector<16x64xbf16>,
    return
  }
  func.func @transform_0(%arg0: i32) -> (i32, i32) {
    %c0_i32 = arith.constant 0 : i32
    %c0_i32_0 = arith.constant 0 : i32
    %c0_i32_1 = arith.constant 0 : i32
    return %c0_i32, %c0_i32_0 : i32, i32
  }
  func.func @transform_1(%arg0: i32) -> (i32, i32) {
    %c0_i32 = arith.constant 0 : i32
    %c0_i32_0 = arith.constant 0 : i32
    %c0_i32_1 = arith.constant 0 : i32
    return %c0_i32, %c0_i32_0 : i32, i32
  }
  func.func @transform_2(%arg0: i32) -> (i32, i32) {
    %c0_i32 = arith.constant 0 : i32
    %c0_i32_0 = arith.constant 0 : i32
    %c0_i32_1 = arith.constant 0 : i32
    return %c0_i32, %c0_i32_0 : i32, i32
  }
}

module attributes {stable_mosaic.version = 11 : i64} {
  func.func @matmul_right_bias_kernel(%arg0: i32, %arg1: memref<128x8xbf16, #tpu.memory_space<vmem>>, %arg2: memref<8x16xbf16, #tpu.memory_space<vmem>>, %arg3: memref<128x1xf32, #tpu.memory_space<vmem>>, %arg4: memref<128x16xbf16, #tpu.memory_space<vmem>>) attributes {dimension_semantics = [#tpu.dimension_semantics<arbitrary>], iteration_bounds = array<i64: 1>, scalar_prefetch = 0 : i64, scratch_operands = 0 : i64, tpu.core_type = #tpu.core_type<tc>, window_params = [{pipeline_mode = #tpu.pipeline_mode<synchronous>, transform_indices = @transform_0, window_bounds = array<i64: 128, 8>}, {pipeline_mode = #tpu.pipeline_mode<synchronous>, transform_indices = @transform_1, window_bounds = array<i64: 8, 16>}, {pipeline_mode = #tpu.pipeline_mode<synchronous>, transform_indices = @transform_2, window_bounds = array<i64: 128, 1>}, {pipeline_mode = #tpu.pipeline_mode<synchronous>, transform_indices = @transform_3, window_bounds = array<i64: 128, 16>}]} {
    %c0 = arith.constant 0 : index
    %c0_0 = arith.constant 0 : index
    %0 = vector.load %arg1[%c0, %c0_0] : memref<128x8xbf16, #tpu.memory_space<vmem>>, vector<128x8xbf16>
    %c0_1 = arith.constant 0 : index
    %c0_2 = arith.constant 0 : index
    %1 = vector.load %arg2[%c0_1, %c0_2] : memref<8x16xbf16, #tpu.memory_space<vmem>>, vector<8x16xbf16>
    %cst = arith.constant dense<0.000000e+00> : vector<128x16xf32>
    %2 = tpu.matmul %0, %1, %cst {dimension_numbers = #tpu.dot_dimension_numbers<[1], [0], [0], [1], [0, 0, 1, 1], [], []>} : vector<128x8xbf16>, vector<8x16xbf16>, vector<128x16xf32> -> vector<128x16xf32>
    %c0_3 = arith.constant 0 : index
    %c0_4 = arith.constant 0 : index
    %3 = vector.load %arg3[%c0_3, %c0_4] : memref<128x1xf32, #tpu.memory_space<vmem>>, vector<128x1xf32>
    %4 = vector.broadcast %3 : vector<128x1xf32> to vector<128x16xf32>
    %5 = arith.addf %2, %4 : vector<128x16xf32>
    %6 = arith.truncf %5 : vector<128x16xf32> to vector<128x16xbf16>
    %c0_5 = arith.constant 0 : index
    %c0_6 = arith.constant 0 : index
    %7 = vector.load %arg4[%c0_5, %c0_6] : memref<128x16xbf16, #tpu.memory_space<vmem>>, vector<128x16xbf16>
    tpu.vector_store %arg4[%c0_5, %c0_6], %6 {strides = array<i32>} : memref<128x16xbf16, #tpu.memory_space<vmem>>, vector<128x16xbf16>,
    return
  }
  func.func @transform_0(%arg0: i32) -> (i32, i32) {
    %c0_i32 = arith.constant 0 : i32
    %c0_i32_0 = arith.constant 0 : i32
    %c0_i32_1 = arith.constant 0 : i32
    return %c0_i32, %c0_i32_0 : i32, i32
  }
  func.func @transform_1(%arg0: i32) -> (i32, i32) {
    %c0_i32 = arith.constant 0 : i32
    %c0_i32_0 = arith.constant 0 : i32
    %c0_i32_1 = arith.constant 0 : i32
    return %c0_i32, %c0_i32_0 : i32, i32
  }
  func.func @transform_2(%arg0: i32) -> (i32, i32) {
    %c0_i32 = arith.constant 0 : i32
    %c0_i32_0 = arith.constant 0 : i32
    %c0_i32_1 = arith.constant 0 : i32
    return %c0_i32, %c0_i32_0 : i32, i32
  }
  func.func @transform_3(%arg0: i32) -> (i32, i32) {
    %c0_i32 = arith.constant 0 : i32
    %c0_i32_0 = arith.constant 0 : i32
    %c0_i32_1 = arith.constant 0 : i32
    return %c0_i32, %c0_i32_0 : i32, i32
  }
}

module attributes {stable_mosaic.version = 11 : i64} {
  func.func @double_conv_kernel(%arg0: i32, %arg1: memref<1x16x422xbf16, #tpu.memory_space<vmem>>, %arg2: memref<16x144xbf16, #tpu.memory_space<vmem>>, %arg3: memref<16x1xf32, #tpu.memory_space<vmem>>, %arg4: memref<16x1xf32, #tpu.memory_space<vmem>>, %arg5: memref<16x144xbf16, #tpu.memory_space<vmem>>, %arg6: memref<16x1xf32, #tpu.memory_space<vmem>>, %arg7: memref<16x1xf32, #tpu.memory_space<vmem>>, %arg8: memref<1x384xf32, #tpu.memory_space<vmem>>, %arg9: memref<1x16x384xf32, #tpu.memory_space<vmem>>, %arg10: memref<144x384xbf16, #tpu.memory_space<vmem>>, %arg11: memref<16x422xbf16, #tpu.memory_space<vmem>>, %arg12: memref<144x384xbf16, #tpu.memory_space<vmem>>) attributes {dimension_semantics = [#tpu.dimension_semantics<parallel>], iteration_bounds = array<i64: 2>, scalar_prefetch = 0 : i64, scratch_operands = 3 : i64, tpu.core_type = #tpu.core_type<tc>, window_params = [{transform_indices = @transform_0, window_bounds = array<i64: 1, 16, 422>}, {pipeline_mode = #tpu.pipeline_mode<synchronous>, transform_indices = @transform_1, window_bounds = array<i64: 16, 144>}, {pipeline_mode = #tpu.pipeline_mode<synchronous>, transform_indices = @transform_2, window_bounds = array<i64: 16, 1>}, {pipeline_mode = #tpu.pipeline_mode<synchronous>, transform_indices = @transform_3, window_bounds = array<i64: 16, 1>}, {pipeline_mode = #tpu.pipeline_mode<synchronous>, transform_indices = @transform_4, window_bounds = array<i64: 16, 144>}, {pipeline_mode = #tpu.pipeline_mode<synchronous>, transform_indices = @transform_5, window_bounds = array<i64: 16, 1>}, {pipeline_mode = #tpu.pipeline_mode<synchronous>, transform_indices = @transform_6, window_bounds = array<i64: 16, 1>}, {pipeline_mode = #tpu.pipeline_mode<synchronous>, transform_indices = @transform_7, window_bounds = array<i64: 1, 384>}, {transform_indices = @transform_8, window_bounds = array<i64: 1, 16, 384>}]} {
    %c0 = arith.constant 0 : index
    %c0_0 = arith.constant 0 : index
    %c0_1 = arith.constant 0 : index
    %0 = vector.load %arg1[%c0, %c0_0, %c0_1] : memref<1x16x422xbf16, #tpu.memory_space<vmem>>, vector<1x16x422xbf16>
    %1 = vector.shape_cast %0 : vector<1x16x422xbf16> to vector<16x422xbf16>
    %2 = vector.extract_strided_slice %1 {offsets = [0, 0], sizes = [16, 384], strides = [1, 1]} : vector<16x422xbf16> to vector<16x384xbf16>
    %c0_2 = arith.constant 0 : index
    %c0_3 = arith.constant 0 : index
    %3 = vector.load %arg10[%c0_2, %c0_3] : memref<144x384xbf16, #tpu.memory_space<vmem>>, vector<16x384xbf16>
    tpu.vector_store %arg10[%c0_2, %c0_3], %2 {strides = array<i32>} : memref<144x384xbf16, #tpu.memory_space<vmem>>, vector<16x384xbf16>,
    %4 = vector.extract_strided_slice %1 {offsets = [0, 1], sizes = [16, 384], strides = [1, 1]} : vector<16x422xbf16> to vector<16x384xbf16>
    %c16 = arith.constant 16 : index
    %c0_4 = arith.constant 0 : index
    %5 = vector.load %arg10[%c16, %c0_4] : memref<144x384xbf16, #tpu.memory_space<vmem>>, vector<16x384xbf16>
    tpu.vector_store %arg10[%c16, %c0_4], %4 {strides = array<i32>} : memref<144x384xbf16, #tpu.memory_space<vmem>>, vector<16x384xbf16>,
    %6 = vector.extract_strided_slice %1 {offsets = [0, 2], sizes = [16, 384], strides = [1, 1]} : vector<16x422xbf16> to vector<16x384xbf16>
    %c32 = arith.constant 32 : index
    %c0_5 = arith.constant 0 : index
    %7 = vector.load %arg10[%c32, %c0_5] : memref<144x384xbf16, #tpu.memory_space<vmem>>, vector<16x384xbf16>
    tpu.vector_store %arg10[%c32, %c0_5], %6 {strides = array<i32>} : memref<144x384xbf16, #tpu.memory_space<vmem>>, vector<16x384xbf16>,
    %8 = vector.extract_strided_slice %1 {offsets = [0, 18], sizes = [16, 384], strides = [1, 1]} : vector<16x422xbf16> to vector<16x384xbf16>
    %c48 = arith.constant 48 : index
    %c0_6 = arith.constant 0 : index
    %9 = vector.load %arg10[%c48, %c0_6] : memref<144x384xbf16, #tpu.memory_space<vmem>>, vector<16x384xbf16>
    tpu.vector_store %arg10[%c48, %c0_6], %8 {strides = array<i32>} : memref<144x384xbf16, #tpu.memory_space<vmem>>, vector<16x384xbf16>,
    %10 = vector.extract_strided_slice %1 {offsets = [0, 19], sizes = [16, 384], strides = [1, 1]} : vector<16x422xbf16> to vector<16x384xbf16>
    %c64 = arith.constant 64 : index
    %c0_7 = arith.constant 0 : index
    %11 = vector.load %arg10[%c64, %c0_7] : memref<144x384xbf16, #tpu.memory_space<vmem>>, vector<16x384xbf16>
    tpu.vector_store %arg10[%c64, %c0_7], %10 {strides = array<i32>} : memref<144x384xbf16, #tpu.memory_space<vmem>>, vector<16x384xbf16>,
    %12 = vector.extract_strided_slice %1 {offsets = [0, 20], sizes = [16, 384], strides = [1, 1]} : vector<16x422xbf16> to vector<16x384xbf16>
    %c80 = arith.constant 80 : index
    %c0_8 = arith.constant 0 : index
    %13 = vector.load %arg10[%c80, %c0_8] : memref<144x384xbf16, #tpu.memory_space<vmem>>, vector<16x384xbf16>
    tpu.vector_store %arg10[%c80, %c0_8], %12 {strides = array<i32>} : memref<144x384xbf16, #tpu.memory_space<vmem>>, vector<16x384xbf16>,
    %14 = vector.extract_strided_slice %1 {offsets = [0, 36], sizes = [16, 384], strides = [1, 1]} : vector<16x422xbf16> to vector<16x384xbf16>
    %c96 = arith.constant 96 : index
    %c0_9 = arith.constant 0 : index
    %15 = vector.load %arg10[%c96, %c0_9] : memref<144x384xbf16, #tpu.memory_space<vmem>>, vector<16x384xbf16>
    tpu.vector_store %arg10[%c96, %c0_9], %14 {strides = array<i32>} : memref<144x384xbf16, #tpu.memory_space<vmem>>, vector<16x384xbf16>,
    %16 = vector.extract_strided_slice %1 {offsets = [0, 37], sizes = [16, 384], strides = [1, 1]} : vector<16x422xbf16> to vector<16x384xbf16>
    %c112 = arith.constant 112 : index
    %c0_10 = arith.constant 0 : index
    %17 = vector.load %arg10[%c112, %c0_10] : memref<144x384xbf16, #tpu.memory_space<vmem>>, vector<16x384xbf16>
    tpu.vector_store %arg10[%c112, %c0_10], %16 {strides = array<i32>} : memref<144x384xbf16, #tpu.memory_space<vmem>>, vector<16x384xbf16>,
    %18 = vector.extract_strided_slice %1 {offsets = [0, 38], sizes = [16, 384], strides = [1, 1]} : vector<16x422xbf16> to vector<16x384xbf16>
    %c128 = arith.constant 128 : index
    %c0_11 = arith.constant 0 : index
    %19 = vector.load %arg10[%c128, %c0_11] : memref<144x384xbf16, #tpu.memory_space<vmem>>, vector<16x384xbf16>
    tpu.vector_store %arg10[%c128, %c0_11], %18 {strides = array<i32>} : memref<144x384xbf16, #tpu.memory_space<vmem>>, vector<16x384xbf16>,
    %c0_12 = arith.constant 0 : index
    %c0_13 = arith.constant 0 : index
    %20 = vector.load %arg2[%c0_12, %c0_13] : memref<16x144xbf16, #tpu.memory_space<vmem>>, vector<16x144xbf16>
    %c0_14 = arith.constant 0 : index
    %c0_15 = arith.constant 0 : index
    %21 = vector.load %arg10[%c0_14, %c0_15] : memref<144x384xbf16, #tpu.memory_space<vmem>>, vector<144x384xbf16>
    %cst = arith.constant dense<0.000000e+00> : vector<16x384xf32>
    %22 = tpu.matmul %20, %21, %cst {dimension_numbers = #tpu.dot_dimension_numbers<[1], [0], [0], [1], [0, 0, 1, 1], [], []>} : vector<16x144xbf16>, vector<144x384xbf16>, vector<16x384xf32> -> vector<16x384xf32>
    %c0_16 = arith.constant 0 : index
    %c0_17 = arith.constant 0 : index
    %23 = vector.load %arg3[%c0_16, %c0_17] : memref<16x1xf32, #tpu.memory_space<vmem>>, vector<16x1xf32>
    %24 = vector.broadcast %23 : vector<16x1xf32> to vector<16x384xf32>
    %25 = arith.mulf %22, %24 : vector<16x384xf32>
    %c0_18 = arith.constant 0 : index
    %c0_19 = arith.constant 0 : index
    %26 = vector.load %arg4[%c0_18, %c0_19] : memref<16x1xf32, #tpu.memory_space<vmem>>, vector<16x1xf32>
    %27 = vector.broadcast %26 : vector<16x1xf32> to vector<16x384xf32>
    %28 = arith.addf %25, %27 : vector<16x384xf32>
    %cst_20 = arith.constant 0.000000e+00 : f32
    %29 = vector.broadcast %cst_20 : f32 to vector<16x384xf32>
    %30 = arith.maximumf %28, %29 : vector<16x384xf32>
    %c0_21 = arith.constant 0 : index
    %c0_22 = arith.constant 0 : index
    %31 = vector.load %arg8[%c0_21, %c0_22] : memref<1x384xf32, #tpu.memory_space<vmem>>, vector<1x384xf32>
    %32 = vector.broadcast %31 : vector<1x384xf32> to vector<16x384xf32>
    %33 = arith.mulf %30, %32 : vector<16x384xf32>
    %cst_23 = arith.constant 0.000000e+00 : bf16
    %34 = vector.broadcast %cst_23 : bf16 to vector<16x19xbf16>
    %c0_24 = arith.constant 0 : index
    %c0_25 = arith.constant 0 : index
    %35 = vector.load %arg11[%c0_24, %c0_25] : memref<16x422xbf16, #tpu.memory_space<vmem>>, vector<16x19xbf16>
    tpu.vector_store %arg11[%c0_24, %c0_25], %34 {strides = array<i32>} : memref<16x422xbf16, #tpu.memory_space<vmem>>, vector<16x19xbf16>,
    %cst_26 = arith.constant 0.000000e+00 : bf16
    %36 = vector.broadcast %cst_26 : bf16 to vector<16x19xbf16>
    %c0_27 = arith.constant 0 : index
    %c403 = arith.constant 403 : index
    %37 = vector.load %arg11[%c0_27, %c403] : memref<16x422xbf16, #tpu.memory_space<vmem>>, vector<16x19xbf16>
    tpu.vector_store %arg11[%c0_27, %c403], %36 {strides = array<i32>} : memref<16x422xbf16, #tpu.memory_space<vmem>>, vector<16x19xbf16>,
    %38 = arith.truncf %33 : vector<16x384xf32> to vector<16x384xbf16>
    %c0_28 = arith.constant 0 : index
    %c19 = arith.constant 19 : index
    %39 = vector.load %arg11[%c0_28, %c19] : memref<16x422xbf16, #tpu.memory_space<vmem>>, vector<16x384xbf16>
    tpu.vector_store %arg11[%c0_28, %c19], %38 {strides = array<i32>} : memref<16x422xbf16, #tpu.memory_space<vmem>>, vector<16x384xbf16>,
    %c0_29 = arith.constant 0 : index
    %c0_30 = arith.constant 0 : index
    %40 = vector.load %arg11[%c0_29, %c0_30] : memref<16x422xbf16, #tpu.memory_space<vmem>>, vector<16x384xbf16>
    %c0_31 = arith.constant 0 : index
    %c0_32 = arith.constant 0 : index
    %41 = vector.load %arg12[%c0_31, %c0_32] : memref<144x384xbf16, #tpu.memory_space<vmem>>, vector<16x384xbf16>
    tpu.vector_store %arg12[%c0_31, %c0_32], %40 {strides = array<i32>} : memref<144x384xbf16, #tpu.memory_space<vmem>>, vector<16x384xbf16>,
    %c0_33 = arith.constant 0 : index
    %c1 = arith.constant 1 : index
    %42 = vector.load %arg11[%c0_33, %c1] : memref<16x422xbf16, #tpu.memory_space<vmem>>, vector<16x384xbf16>
    %c16_34 = arith.constant 16 : index
    %c0_35 = arith.constant 0 : index
    %43 = vector.load %arg12[%c16_34, %c0_35] : memref<144x384xbf16, #tpu.memory_space<vmem>>, vector<16x384xbf16>
    tpu.vector_store %arg12[%c16_34, %c0_35], %42 {strides = array<i32>} : memref<144x384xbf16, #tpu.memory_space<vmem>>, vector<16x384xbf16>,
    %c0_36 = arith.constant 0 : index
    %c2 = arith.constant 2 : index
    %44 = vector.load %arg11[%c0_36, %c2] : memref<16x422xbf16, #tpu.memory_space<vmem>>, vector<16x384xbf16>
    %c32_37 = arith.constant 32 : index
    %c0_38 = arith.constant 0 : index
    %45 = vector.load %arg12[%c32_37, %c0_38] : memref<144x384xbf16, #tpu.memory_space<vmem>>, vector<16x384xbf16>
    tpu.vector_store %arg12[%c32_37, %c0_38], %44 {strides = array<i32>} : memref<144x384xbf16, #tpu.memory_space<vmem>>, vector<16x384xbf16>,
    %c0_39 = arith.constant 0 : index
    %c18 = arith.constant 18 : index
    %46 = vector.load %arg11[%c0_39, %c18] : memref<16x422xbf16, #tpu.memory_space<vmem>>, vector<16x384xbf16>
    %c48_40 = arith.constant 48 : index
    %c0_41 = arith.constant 0 : index
    %47 = vector.load %arg12[%c48_40, %c0_41] : memref<144x384xbf16, #tpu.memory_space<vmem>>, vector<16x384xbf16>
    tpu.vector_store %arg12[%c48_40, %c0_41], %46 {strides = array<i32>} : memref<144x384xbf16, #tpu.memory_space<vmem>>, vector<16x384xbf16>,
    %c0_42 = arith.constant 0 : index
    %c19_43 = arith.constant 19 : index
    %48 = vector.load %arg11[%c0_42, %c19_43] : memref<16x422xbf16, #tpu.memory_space<vmem>>, vector<16x384xbf16>
    %c64_44 = arith.constant 64 : index
    %c0_45 = arith.constant 0 : index
    %49 = vector.load %arg12[%c64_44, %c0_45] : memref<144x384xbf16, #tpu.memory_space<vmem>>, vector<16x384xbf16>
    tpu.vector_store %arg12[%c64_44, %c0_45], %48 {strides = array<i32>} : memref<144x384xbf16, #tpu.memory_space<vmem>>, vector<16x384xbf16>,
    %c0_46 = arith.constant 0 : index
    %c20 = arith.constant 20 : index
    %50 = vector.load %arg11[%c0_46, %c20] : memref<16x422xbf16, #tpu.memory_space<vmem>>, vector<16x384xbf16>
    %c80_47 = arith.constant 80 : index
    %c0_48 = arith.constant 0 : index
    %51 = vector.load %arg12[%c80_47, %c0_48] : memref<144x384xbf16, #tpu.memory_space<vmem>>, vector<16x384xbf16>
    tpu.vector_store %arg12[%c80_47, %c0_48], %50 {strides = array<i32>} : memref<144x384xbf16, #tpu.memory_space<vmem>>, vector<16x384xbf16>,
    %c0_49 = arith.constant 0 : index
    %c36 = arith.constant 36 : index
    %52 = vector.load %arg11[%c0_49, %c36] : memref<16x422xbf16, #tpu.memory_space<vmem>>, vector<16x384xbf16>
    %c96_50 = arith.constant 96 : index
    %c0_51 = arith.constant 0 : index
    %53 = vector.load %arg12[%c96_50, %c0_51] : memref<144x384xbf16, #tpu.memory_space<vmem>>, vector<16x384xbf16>
    tpu.vector_store %arg12[%c96_50, %c0_51], %52 {strides = array<i32>} : memref<144x384xbf16, #tpu.memory_space<vmem>>, vector<16x384xbf16>,
    %c0_52 = arith.constant 0 : index
    %c37 = arith.constant 37 : index
    %54 = vector.load %arg11[%c0_52, %c37] : memref<16x422xbf16, #tpu.memory_space<vmem>>, vector<16x384xbf16>
    %c112_53 = arith.constant 112 : index
    %c0_54 = arith.constant 0 : index
    %55 = vector.load %arg12[%c112_53, %c0_54] : memref<144x384xbf16, #tpu.memory_space<vmem>>, vector<16x384xbf16>
    tpu.vector_store %arg12[%c112_53, %c0_54], %54 {strides = array<i32>} : memref<144x384xbf16, #tpu.memory_space<vmem>>, vector<16x384xbf16>,
    %c0_55 = arith.constant 0 : index
    %c38 = arith.constant 38 : index
    %56 = vector.load %arg11[%c0_55, %c38] : memref<16x422xbf16, #tpu.memory_space<vmem>>, vector<16x384xbf16>
    %c128_56 = arith.constant 128 : index
    %c0_57 = arith.constant 0 : index
    %57 = vector.load %arg12[%c128_56, %c0_57] : memref<144x384xbf16, #tpu.memory_space<vmem>>, vector<16x384xbf16>
    tpu.vector_store %arg12[%c128_56, %c0_57], %56 {strides = array<i32>} : memref<144x384xbf16, #tpu.memory_space<vmem>>, vector<16x384xbf16>,
    %c0_58 = arith.constant 0 : index
    %c0_59 = arith.constant 0 : index
    %58 = vector.load %arg5[%c0_58, %c0_59] : memref<16x144xbf16, #tpu.memory_space<vmem>>, vector<16x144xbf16>
    %c0_60 = arith.constant 0 : index
    %c0_61 = arith.constant 0 : index
    %59 = vector.load %arg12[%c0_60, %c0_61] : memref<144x384xbf16, #tpu.memory_space<vmem>>, vector<144x384xbf16>
    %cst_62 = arith.constant dense<0.000000e+00> : vector<16x384xf32>
    %60 = tpu.matmul %58, %59, %cst_62 {dimension_numbers = #tpu.dot_dimension_numbers<[1], [0], [0], [1], [0, 0, 1, 1], [], []>} : vector<16x144xbf16>, vector<144x384xbf16>, vector<16x384xf32> -> vector<16x384xf32>
    %c0_63 = arith.constant 0 : index
    %c0_64 = arith.constant 0 : index
    %61 = vector.load %arg6[%c0_63, %c0_64] : memref<16x1xf32, #tpu.memory_space<vmem>>, vector<16x1xf32>
    %62 = vector.broadcast %61 : vector<16x1xf32> to vector<16x384xf32>
    %63 = arith.mulf %60, %62 : vector<16x384xf32>
    %c0_65 = arith.constant 0 : index
    %c0_66 = arith.constant 0 : index
    %64 = vector.load %arg7[%c0_65, %c0_66] : memref<16x1xf32, #tpu.memory_space<vmem>>, vector<16x1xf32>
    %65 = vector.broadcast %64 : vector<16x1xf32> to vector<16x384xf32>
    %66 = arith.addf %63, %65 : vector<16x384xf32>
    %cst_67 = arith.constant 0.000000e+00 : f32
    %67 = vector.broadcast %cst_67 : f32 to vector<16x384xf32>
    %68 = arith.maximumf %66, %67 : vector<16x384xf32>
    %c0_68 = arith.constant 0 : index
    %c0_69 = arith.constant 0 : index
    %c0_70 = arith.constant 0 : index
    %69 = vector.load %arg9[%c0_68, %c0_69, %c0_70] : memref<1x16x384xf32, #tpu.memory_space<vmem>>, vector<1x16x384xf32>
    %70 = vector.shape_cast %69 : vector<1x16x384xf32> to vector<16x384xf32>
    %71 = vector.shape_cast %68 : vector<16x384xf32> to vector<1x16x384xf32>
    tpu.vector_store %arg9[%c0_68, %c0_69, %c0_70], %71 {strides = array<i32>} : memref<1x16x384xf32, #tpu.memory_space<vmem>>, vector<1x16x384xf32>,
    return
  }
  func.func @transform_0(%arg0: i32) -> (i32, i32, i32) {
    %c0_i32 = arith.constant 0 : i32
    %c0_i32_0 = arith.constant 0 : i32
    %c0_i32_1 = arith.constant 0 : i32
    return %arg0, %c0_i32, %c0_i32_0 : i32, i32, i32
  }
  func.func @transform_1(%arg0: i32) -> (i32, i32) {
    %c0_i32 = arith.constant 0 : i32
    %c0_i32_0 = arith.constant 0 : i32
    %c0_i32_1 = arith.constant 0 : i32
    return %c0_i32, %c0_i32_0 : i32, i32
  }
  func.func @transform_2(%arg0: i32) -> (i32, i32) {
    %c0_i32 = arith.constant 0 : i32
    %c0_i32_0 = arith.constant 0 : i32
    %c0_i32_1 = arith.constant 0 : i32
    return %c0_i32, %c0_i32_0 : i32, i32
  }
  func.func @transform_3(%arg0: i32) -> (i32, i32) {
    %c0_i32 = arith.constant 0 : i32
    %c0_i32_0 = arith.constant 0 : i32
    %c0_i32_1 = arith.constant 0 : i32
    return %c0_i32, %c0_i32_0 : i32, i32
  }
  func.func @transform_4(%arg0: i32) -> (i32, i32) {
    %c0_i32 = arith.constant 0 : i32
    %c0_i32_0 = arith.constant 0 : i32
    %c0_i32_1 = arith.constant 0 : i32
    return %c0_i32, %c0_i32_0 : i32, i32
  }
  func.func @transform_5(%arg0: i32) -> (i32, i32) {
    %c0_i32 = arith.constant 0 : i32
    %c0_i32_0 = arith.constant 0 : i32
    %c0_i32_1 = arith.constant 0 : i32
    return %c0_i32, %c0_i32_0 : i32, i32
  }
  func.func @transform_6(%arg0: i32) -> (i32, i32) {
    %c0_i32 = arith.constant 0 : i32
    %c0_i32_0 = arith.constant 0 : i32
    %c0_i32_1 = arith.constant 0 : i32
    return %c0_i32, %c0_i32_0 : i32, i32
  }
  func.func @transform_7(%arg0: i32) -> (i32, i32) {
    %c0_i32 = arith.constant 0 : i32
    %c0_i32_0 = arith.constant 0 : i32
    %c0_i32_1 = arith.constant 0 : i32
    return %c0_i32, %c0_i32_0 : i32, i32
  }
  func.func @transform_8(%arg0: i32) -> (i32, i32, i32) {
    %c0_i32 = arith.constant 0 : i32
    %c0_i32_0 = arith.constant 0 : i32
    %c0_i32_1 = arith.constant 0 : i32
    return %arg0, %c0_i32, %c0_i32_0 : i32, i32, i32
  }
}

</mosaic_0001>

<llo_original>
// kernel: up_conv2d_forward.4
$region0: #{up_conv2d_forward.4}
  #allocation0 [shape = 'u32[]', space=smem, size = 0x4, offset = 0x4, fixed_abs, tag = 'smem constant byte address 0x4 - core index']
  #allocation1 [shape = 'u32[144,128]{1,0:T(1,128)}', space=vmem, size = 0x12000, scoped, tag = 'internal scratch']
  %s0 = inlined_call_operand.vmem [shape: bf16[4,8], index: 0, kind: input, shape index: {}]
  %s1 = inlined_call_operand.vmem [shape: bf16[8,128], index: 1, kind: input, shape index: {}]
  %s2 = inlined_call_operand.vmem [shape: bf16[4,128], index: 2, kind: output, shape index: {}]
  %s3 = sld [smem:[#allocation0]]
  $region18: #{up_conv2d_forward.4} parent=0
    _
  %s5 = ssub.s32 1, %s3
  %s6 = scalar_select 0, %s5, %s3
  // Predicated region
  $region2: #{up_conv2d_forward.4} parent=0 // pred_check
    _
  $region3: #{up_conv2d_forward.4} parent=0 // pred_check_branch
    %8 = sbr.rel (0) target = $region5
  $region4: #{up_conv2d_forward.4} parent=0 // pred_region
    _
  $region5: #{up_conv2d_forward.4} parent=0 // pred_fallthru
    _
  // Predicated region
  $region6: #{up_conv2d_forward.4} parent=0 // pred_check
    _
  $region7: #{up_conv2d_forward.4} parent=0 // pred_check_branch
    %10 = sbr.rel (0) target = $region9
  $region8: #{up_conv2d_forward.4} parent=0 // pred_region
    _
  $region9: #{up_conv2d_forward.4} parent=0 // pred_fallthru
    _
  %v12 = vld [vmem:[%s0] sm:$0x3]
  %v13 = vld [vmem:[%s1] sm:$0xf]
  %vm14 = vcmask 64512
  %v16 = vsel %vm14, %v12, 0
  %vm18 = vcmask 1043456
  %v20 = vsel %vm18, %v13, 0
  %22 = vmatprep.subr.bf16.mxu0 0
  %23 = vmatpush1.bf16.msra.mxu0 %v20
  %24 = vmatprep.subr.bf16.mxu0 0
  %25 = vmatpush1.bf16.msra.mxu0 0
  %26 = vmatprep.subr.bf16.mxu0 0
  %27 = vmatpush1.bf16.msra.mxu0 0
  %28 = vmatprep.subr.bf16.mxu0 0
  %29 = vmatpush1.bf16.msra.mxu0 0
  %30 = vmatprep.subr.bf16.mxu0 0
  %31 = vmatpush1.bf16.msra.mxu0 0
  %32 = vmatprep.subr.bf16.mxu0 0
  %33 = vmatpush1.bf16.msra.mxu0 0
  %34 = vmatprep.subr.bf16.mxu0 0
  %35 = vmatpush1.bf16.msra.mxu0 0
  %36 = vmatprep.subr.bf16.mxu0 0
  %37 = vmatpush1.bf16.msra.mxu0 0
  %38 = vmatprep.subr.bf16.mxu0 0
  %39 = vmatpush1.bf16.msra.mxu0 0
  %40 = vmatprep.subr.bf16.mxu0 0
  %41 = vmatpush1.bf16.msra.mxu0 0
  %42 = vmatprep.subr.bf16.mxu0 0
  %43 = vmatpush1.bf16.msra.mxu0 0
  %44 = vmatprep.subr.bf16.mxu0 0
  %45 = vmatpush1.bf16.msra.mxu0 0
  %46 = vmatprep.subr.bf16.mxu0 0
  %47 = vmatpush1.bf16.msra.mxu0 0
  %48 = vmatprep.subr.bf16.mxu0 0
  %49 = vmatpush1.bf16.msra.mxu0 0
  %50 = vmatprep.subr.bf16.mxu0 0
  %51 = vmatpush1.bf16.msra.mxu0 0
  %52 = vmatprep.subr.bf16.mxu0 0
  %53 = vmatpush1.bf16.msra.mxu0 0
  %54 = vmatprep.mubr.bf16.mxu0 0
  %55 = vmatmul.mubr.bf16.gmra.mrb[0].mxu0 %v16
  %v56 = vpop.f32.mrb[0].mxu0
  %v57 = vadd.f32 0.0, %v56
  %v58 = vpop.f32.mrb[0].mxu0
  %v59 = vpop.f32.mrb[0].mxu0
  %v60 = vpop.f32.mrb[0].mxu0
  %61 = vdwg.mxu0
  %v62 = vpack.c.bf16 %v57, %v57
  %63 = vst [vmem:[%s2] sm:$0x3] %v62
  // Predicated region
  $region10: #{up_conv2d_forward.4} parent=0 // pred_check
    _
  $region11: #{up_conv2d_forward.4} parent=0 // pred_check_branch
    %65 = sbr.rel (0) target = $region13
  $region12: #{up_conv2d_forward.4} parent=0 // pred_region
    _
  $region13: #{up_conv2d_forward.4} parent=0 // pred_fallthru
    _
  // Predicated region
  $region14: #{up_conv2d_forward.4} parent=0 // pred_check
    _
  $region15: #{up_conv2d_forward.4} parent=0 // pred_check_branch
    %67 = sbr.rel (0) target = $region17
  $region16: #{up_conv2d_forward.4} parent=0 // pred_region
    _
  $region17: #{up_conv2d_forward.4} parent=0 // pred_fallthru
    _

// kernel: up_conv2d_forward.5
$region0: #{up_conv2d_forward.5}
  #allocation0 [shape = 'u32[]', space=smem, size = 0x4, offset = 0x4, fixed_abs, tag = 'smem constant byte address 0x4 - core index']
  #allocation1 [shape = 'u32[144,128]{1,0:T(1,128)}', space=vmem, size = 0x12000, scoped, tag = 'internal scratch']
  %s0 = inlined_call_operand.vmem [shape: bf16[16,8], index: 0, kind: input, shape index: {}]
  %s1 = inlined_call_operand.vmem [shape: bf16[8,64], index: 1, kind: input, shape index: {}]
  %s2 = inlined_call_operand.vmem [shape: bf16[16,64], index: 2, kind: output, shape index: {}]
  %s3 = sld [smem:[#allocation0]]
  $region18: #{up_conv2d_forward.5} parent=0
    _
  %s5 = ssub.s32 1, %s3
  %s6 = scalar_select 0, %s5, %s3
  // Predicated region
  $region2: #{up_conv2d_forward.5} parent=0 // pred_check
    _
  $region3: #{up_conv2d_forward.5} parent=0 // pred_check_branch
    %8 = sbr.rel (0) target = $region5
  $region4: #{up_conv2d_forward.5} parent=0 // pred_region
    _
  $region5: #{up_conv2d_forward.5} parent=0 // pred_fallthru
    _
  // Predicated region
  $region6: #{up_conv2d_forward.5} parent=0 // pred_check
    _
  $region7: #{up_conv2d_forward.5} parent=0 // pred_check_branch
    %10 = sbr.rel (0) target = $region9
  $region8: #{up_conv2d_forward.5} parent=0 // pred_region
    _
  $region9: #{up_conv2d_forward.5} parent=0 // pred_fallthru
    _
  %v12 = vld [vmem:[%s0] sm:$0xf]
  %v13 = vld [vmem:[%s0 + $0x4] sm:$0xf]
  %v14 = vld [vmem:[%s1] sm:$0xf]
  %v17 = vunpack.c.l.b16 %v12
  %v18 = vunpack.c.l.b16 %v13
  %v19 = vpack.c.b16 %v18, %v17
  %vm20 = vcmask 64512
  %v22 = vsel %vm20, %v19, 0
  %vm24 = vcmask 1043456
  %v26 = vsel %vm24, %v14, 0
  %28 = vmatprep.subr.bf16.mxu0 0
  %29 = vmatpush1.bf16.msra.mxu0 %v26
  %30 = vmatprep.subr.bf16.mxu0 0
  %31 = vmatpush1.bf16.msra.mxu0 0
  %32 = vmatprep.subr.bf16.mxu0 0
  %33 = vmatpush1.bf16.msra.mxu0 0
  %34 = vmatprep.subr.bf16.mxu0 0
  %35 = vmatpush1.bf16.msra.mxu0 0
  %36 = vmatprep.subr.bf16.mxu0 0
  %37 = vmatpush1.bf16.msra.mxu0 0
  %38 = vmatprep.subr.bf16.mxu0 0
  %39 = vmatpush1.bf16.msra.mxu0 0
  %40 = vmatprep.subr.bf16.mxu0 0
  %41 = vmatpush1.bf16.msra.mxu0 0
  %42 = vmatprep.subr.bf16.mxu0 0
  %43 = vmatpush1.bf16.msra.mxu0 0
  %44 = vmatprep.subr.bf16.mxu0 0
  %45 = vmatpush1.bf16.msra.mxu0 0
  %46 = vmatprep.subr.bf16.mxu0 0
  %47 = vmatpush1.bf16.msra.mxu0 0
  %48 = vmatprep.subr.bf16.mxu0 0
  %49 = vmatpush1.bf16.msra.mxu0 0
  %50 = vmatprep.subr.bf16.mxu0 0
  %51 = vmatpush1.bf16.msra.mxu0 0
  %52 = vmatprep.subr.bf16.mxu0 0
  %53 = vmatpush1.bf16.msra.mxu0 0
  %54 = vmatprep.subr.bf16.mxu0 0
  %55 = vmatpush1.bf16.msra.mxu0 0
  %56 = vmatprep.subr.bf16.mxu0 0
  %57 = vmatpush1.bf16.msra.mxu0 0
  %58 = vmatprep.subr.bf16.mxu0 0
  %59 = vmatpush1.bf16.msra.mxu0 0
  %60 = vmatprep.mubr.bf16.mxu0 0
  %61 = vmatmul.mubr.bf16.gmra.mrb[0].mxu0 %v22
  %v62 = vpop.f32.mrb[0].mxu0
  %v63 = vadd.f32 0.0, %v62
  %v64 = vpop.f32.mrb[0].mxu0
  %v65 = vpop.f32.mrb[0].mxu0
  %v66 = vadd.f32 0.0, %v65
  %v67 = vpop.f32.mrb[0].mxu0
  %68 = vdwg.mxu0
  %v69 = vpack.c.bf16 %v66, %v63
  %v71 = vunpack.c.l.b16 %v69
  %v72 = vunpack.c.h.b16 %v69
  %v73 = vpack.c.b16 %v71, %v71
  %v74 = vpack.c.b16 %v72, %v72
  %vm77 = vcmask 519168
  %78 = vst.msk [vmem:[%s2] sm:$0xf] %vm77, %v73
  %79 = vst.msk [vmem:[%s2 + $0x4] sm:$0xf] %vm77, %v74
  // Predicated region
  $region10: #{up_conv2d_forward.5} parent=0 // pred_check
    _
  $region11: #{up_conv2d_forward.5} parent=0 // pred_check_branch
    %81 = sbr.rel (0) target = $region13
  $region12: #{up_conv2d_forward.5} parent=0 // pred_region
    _
  $region13: #{up_conv2d_forward.5} parent=0 // pred_fallthru
    _
  // Predicated region
  $region14: #{up_conv2d_forward.5} parent=0 // pred_check
    _
  $region15: #{up_conv2d_forward.5} parent=0 // pred_check_branch
    %83 = sbr.rel (0) target = $region17
  $region16: #{up_conv2d_forward.5} parent=0 // pred_region
    _
  $region17: #{up_conv2d_forward.5} parent=0 // pred_fallthru
    _

// kernel: up_conv2d_forward.6
$region0: #{up_conv2d_forward.6}
  #allocation0 [shape = 'u32[]', space=smem, size = 0x4, offset = 0x4, fixed_abs, tag = 'smem constant byte address 0x4 - core index']
  #allocation1 [shape = 'u32[144,128]{1,0:T(1,128)}', space=vmem, size = 0x12000, scoped, tag = 'internal scratch']
  %s0 = inlined_call_operand.vmem [shape: bf16[128,8], index: 0, kind: input, shape index: {}]
  %s1 = inlined_call_operand.vmem [shape: bf16[8,16], index: 1, kind: input, shape index: {}]
  %s2 = inlined_call_operand.vmem [shape: f32[128,1], index: 2, kind: input, shape index: {}]
  %s3 = inlined_call_operand.vmem [shape: bf16[128,16], index: 3, kind: output, shape index: {}]
  %s4 = sld [smem:[#allocation0]]
  $region22: #{up_conv2d_forward.6} parent=0
    _
  %s6 = ssub.s32 1, %s4
  %s7 = scalar_select 0, %s6, %s4
  // Predicated region
  $region2: #{up_conv2d_forward.6} parent=0 // pred_check
    _
  $region3: #{up_conv2d_forward.6} parent=0 // pred_check_branch
    %9 = sbr.rel (0) target = $region5
  $region4: #{up_conv2d_forward.6} parent=0 // pred_region
    _
  $region5: #{up_conv2d_forward.6} parent=0 // pred_fallthru
    _
  // Predicated region
  $region6: #{up_conv2d_forward.6} parent=0 // pred_check
    _
  $region7: #{up_conv2d_forward.6} parent=0 // pred_check_branch
    %11 = sbr.rel (0) target = $region9
  $region8: #{up_conv2d_forward.6} parent=0 // pred_region
    _
  $region9: #{up_conv2d_forward.6} parent=0 // pred_fallthru
    _
  // Predicated region
  $region10: #{up_conv2d_forward.6} parent=0 // pred_check
    _
  $region11: #{up_conv2d_forward.6} parent=0 // pred_check_branch
    %13 = sbr.rel (0) target = $region13
  $region12: #{up_conv2d_forward.6} parent=0 // pred_region
    _
  $region13: #{up_conv2d_forward.6} parent=0 // pred_fallthru
    _
  %v15 = vld [vmem:[%s0] sm:$0xf]
  %v16 = vld [vmem:[%s0 + $0x4] sm:$0xf]
  %v17 = vld [vmem:[%s0 + $0x8] sm:$0xf]
  %v18 = vld [vmem:[%s0 + $0xc] sm:$0xf]
  %v19 = vld [vmem:[%s0 + $0x10] sm:$0xf]
  %v20 = vld [vmem:[%s0 + $0x14] sm:$0xf]
  %v21 = vld [vmem:[%s0 + $0x18] sm:$0xf]
  %v22 = vld [vmem:[%s0 + $0x1c] sm:$0xf]
  %v23 = vld [vmem:[%s0 + $0x20] sm:$0xf]
  %v24 = vld [vmem:[%s0 + $0x24] sm:$0xf]
  %v25 = vld [vmem:[%s0 + $0x28] sm:$0xf]
  %v26 = vld [vmem:[%s0 + $0x2c] sm:$0xf]
  %v27 = vld [vmem:[%s0 + $0x30] sm:$0xf]
  %v28 = vld [vmem:[%s0 + $0x34] sm:$0xf]
  %v29 = vld [vmem:[%s0 + $0x38] sm:$0xf]
  %v30 = vld [vmem:[%s0 + $0x3c] sm:$0xf]
  %v31 = vld [vmem:[%s1] sm:$0xf]
  %v32 = vld [vmem:[%s2] sm:$0xff]
  %v33 = vld [vmem:[%s2 + $0x8] sm:$0xff]
  %v34 = vld [vmem:[%s2 + $0x10] sm:$0xff]
  %v35 = vld [vmem:[%s2 + $0x18] sm:$0xff]
  %v36 = vld [vmem:[%s2 + $0x20] sm:$0xff]
  %v37 = vld [vmem:[%s2 + $0x28] sm:$0xff]
  %v38 = vld [vmem:[%s2 + $0x30] sm:$0xff]
  %v39 = vld [vmem:[%s2 + $0x38] sm:$0xff]
  %v40 = vld [vmem:[%s2 + $0x40] sm:$0xff]
  %v41 = vld [vmem:[%s2 + $0x48] sm:$0xff]
  %v42 = vld [vmem:[%s2 + $0x50] sm:$0xff]
  %v43 = vld [vmem:[%s2 + $0x58] sm:$0xff]
  %v44 = vld [vmem:[%s2 + $0x60] sm:$0xff]
  %v45 = vld [vmem:[%s2 + $0x68] sm:$0xff]
  %v46 = vld [vmem:[%s2 + $0x70] sm:$0xff]
  %v47 = vld [vmem:[%s2 + $0x78] sm:$0xff]
  %49 = vset.pattern.permute.xlu0 0
  %50 = vperm.xlu0 %49, %v32
  %v51 = vpop.permute.xlu0 %50
  %54 = vset.pattern.permute.xlu0 0
  %55 = vperm.xlu0 %54, %v33
  %v56 = vpop.permute.xlu0 %55
  %59 = vset.pattern.permute.xlu0 0
  %60 = vperm.xlu0 %59, %v34
  %v61 = vpop.permute.xlu0 %60
  %64 = vset.pattern.permute.xlu0 0
  %65 = vperm.xlu0 %64, %v35
  %v66 = vpop.permute.xlu0 %65
  %69 = vset.pattern.permute.xlu0 0
  %70 = vperm.xlu0 %69, %v36
  %v71 = vpop.permute.xlu0 %70
  %74 = vset.pattern.permute.xlu0 0
  %75 = vperm.xlu0 %74, %v37
  %v76 = vpop.permute.xlu0 %75
  %79 = vset.pattern.permute.xlu0 0
  %80 = vperm.xlu0 %79, %v38
  %v81 = vpop.permute.xlu0 %80
  %84 = vset.pattern.permute.xlu0 0
  %85 = vperm.xlu0 %84, %v39
  %v86 = vpop.permute.xlu0 %85
  %89 = vset.pattern.permute.xlu0 0
  %90 = vperm.xlu0 %89, %v40
  %v91 = vpop.permute.xlu0 %90
  %94 = vset.pattern.permute.xlu0 0
  %95 = vperm.xlu0 %94, %v41
  %v96 = vpop.permute.xlu0 %95
  %99 = vset.pattern.permute.xlu0 0
  %100 = vperm.xlu0 %99, %v42
  %v101 = vpop.permute.xlu0 %100
  %104 = vset.pattern.permute.xlu0 0
  %105 = vperm.xlu0 %104, %v43
  %v106 = vpop.permute.xlu0 %105
  %109 = vset.pattern.permute.xlu0 0
  %110 = vperm.xlu0 %109, %v44
  %v111 = vpop.permute.xlu0 %110
  %114 = vset.pattern.permute.xlu0 0
  %115 = vperm.xlu0 %114, %v45
  %v116 = vpop.permute.xlu0 %115
  %119 = vset.pattern.permute.xlu0 0
  %120 = vperm.xlu0 %119, %v46
  %v121 = vpop.permute.xlu0 %120
  %124 = vset.pattern.permute.xlu0 0
  %125 = vperm.xlu0 %124, %v47
  %v126 = vpop.permute.xlu0 %125
  %v144 = vunpack.c.l.b16 %v15
  %v145 = vunpack.c.l.b16 %v16
  %v146 = vunpack.c.l.b16 %v17
  %v147 = vunpack.c.l.b16 %v18
  %v148 = vunpack.c.l.b16 %v19
  %v149 = vunpack.c.l.b16 %v20
  %v150 = vunpack.c.l.b16 %v21
  %v151 = vunpack.c.l.b16 %v22
  %v152 = vunpack.c.l.b16 %v23
  %v153 = vunpack.c.l.b16 %v24
  %v154 = vunpack.c.l.b16 %v25
  %v155 = vunpack.c.l.b16 %v26
  %v156 = vunpack.c.l.b16 %v27
  %v157 = vunpack.c.l.b16 %v28
  %v158 = vunpack.c.l.b16 %v29
  %v159 = vunpack.c.l.b16 %v30
  %v160 = vpack.c.b16 %v145, %v144
  %v161 = vpack.c.b16 %v147, %v146
  %v162 = vpack.c.b16 %v149, %v148
  %v163 = vpack.c.b16 %v151, %v150
  %v164 = vpack.c.b16 %v153, %v152
  %v165 = vpack.c.b16 %v155, %v154
  %v166 = vpack.c.b16 %v157, %v156
  %v167 = vpack.c.b16 %v159, %v158
  %vm168 = vcmask 64512
  %v170 = vsel %vm168, %v160, 0
  %v173 = vsel %vm168, %v161, 0
  %v176 = vsel %vm168, %v162, 0
  %v179 = vsel %vm168, %v163, 0
  %v182 = vsel %vm168, %v164, 0
  %v185 = vsel %vm168, %v165, 0
  %v188 = vsel %vm168, %v166, 0
  %v191 = vsel %vm168, %v167, 0
  %vm193 = vcmask 1043456
  %v195 = vsel %vm193, %v31, 0
  %197 = vmatprep.subr.bf16.mxu0 0
  %198 = vmatpush1.bf16.msra.mxu0 %v195
  %199 = vmatprep.subr.bf16.mxu0 0
  %200 = vmatpush1.bf16.msra.mxu0 0
  %201 = vmatprep.subr.bf16.mxu0 0
  %202 = vmatpush1.bf16.msra.mxu0 0
  %203 = vmatprep.subr.bf16.mxu0 0
  %204 = vmatpush1.bf16.msra.mxu0 0
  %205 = vmatprep.subr.bf16.mxu0 0
  %206 = vmatpush1.bf16.msra.mxu0 0
  %207 = vmatprep.subr.bf16.mxu0 0
  %208 = vmatpush1.bf16.msra.mxu0 0
  %209 = vmatprep.subr.bf16.mxu0 0
  %210 = vmatpush1.bf16.msra.mxu0 0
  %211 = vmatprep.subr.bf16.mxu0 0
  %212 = vmatpush1.bf16.msra.mxu0 0
  %213 = vmatprep.subr.bf16.mxu0 0
  %214 = vmatpush1.bf16.msra.mxu0 0
  %215 = vmatprep.subr.bf16.mxu0 0
  %216 = vmatpush1.bf16.msra.mxu0 0
  %217 = vmatprep.subr.bf16.mxu0 0
  %218 = vmatpush1.bf16.msra.mxu0 0
  %219 = vmatprep.subr.bf16.mxu0 0
  %220 = vmatpush1.bf16.msra.mxu0 0
  %221 = vmatprep.subr.bf16.mxu0 0
  %222 = vmatpush1.bf16.msra.mxu0 0
  %223 = vmatprep.subr.bf16.mxu0 0
  %224 = vmatpush1.bf16.msra.mxu0 0
  %225 = vmatprep.subr.bf16.mxu0 0
  %226 = vmatpush1.bf16.msra.mxu0 0
  %227 = vmatprep.subr.bf16.mxu0 0
  %228 = vmatpush1.bf16.msra.mxu0 0
  %229 = vmatprep.mubr.bf16.mxu0 0
  %230 = vmatmul.mubr.bf16.gmra.mrb[0].mxu0 %v170
  %v231 = vpop.f32.mrb[0].mxu0
  %v232 = vadd.f32 %v51, %v231
  %v233 = vpop.f32.mrb[0].mxu0
  %v234 = vpop.f32.mrb[0].mxu0
  %v235 = vadd.f32 %v56, %v234
  %v236 = vpop.f32.mrb[0].mxu0
  %237 = vmatprep.mubr.bf16.mxu0 0
  %238 = vmatmul.mubr.bf16.gmra.mrb[0].mxu0 %v173
  %v239 = vpop.f32.mrb[0].mxu0
  %v240 = vadd.f32 %v61, %v239
  %v241 = vpop.f32.mrb[0].mxu0
  %v242 = vpop.f32.mrb[0].mxu0
  %v243 = vadd.f32 %v66, %v242
  %v244 = vpop.f32.mrb[0].mxu0
  %245 = vmatprep.mubr.bf16.mxu0 0
  %246 = vmatmul.mubr.bf16.gmra.mrb[0].mxu0 %v176
  %v247 = vpop.f32.mrb[0].mxu0
  %v248 = vadd.f32 %v71, %v247
  %v249 = vpop.f32.mrb[0].mxu0
  %v250 = vpop.f32.mrb[0].mxu0
  %v251 = vadd.f32 %v76, %v250
  %v252 = vpop.f32.mrb[0].mxu0
  %253 = vmatprep.mubr.bf16.mxu0 0
  %254 = vmatmul.mubr.bf16.gmra.mrb[0].mxu0 %v179
  %v255 = vpop.f32.mrb[0].mxu0
  %v256 = vadd.f32 %v81, %v255
  %v257 = vpop.f32.mrb[0].mxu0
  %v258 = vpop.f32.mrb[0].mxu0
  %v259 = vadd.f32 %v86, %v258
  %v260 = vpop.f32.mrb[0].mxu0
  %261 = vmatprep.mubr.bf16.mxu0 0
  %262 = vmatmul.mubr.bf16.gmra.mrb[0].mxu0 %v182
  %v263 = vpop.f32.mrb[0].mxu0
  %v264 = vadd.f32 %v91, %v263
  %v265 = vpop.f32.mrb[0].mxu0
  %v266 = vpop.f32.mrb[0].mxu0
  %v267 = vadd.f32 %v96, %v266
  %v268 = vpop.f32.mrb[0].mxu0
  %269 = vmatprep.mubr.bf16.mxu0 0
  %270 = vmatmul.mubr.bf16.gmra.mrb[0].mxu0 %v185
  %v271 = vpop.f32.mrb[0].mxu0
  %v272 = vadd.f32 %v101, %v271
  %v273 = vpop.f32.mrb[0].mxu0
  %v274 = vpop.f32.mrb[0].mxu0
  %v275 = vadd.f32 %v106, %v274
  %v276 = vpop.f32.mrb[0].mxu0
  %277 = vmatprep.mubr.bf16.mxu0 0
  %278 = vmatmul.mubr.bf16.gmra.mrb[0].mxu0 %v188
  %v279 = vpop.f32.mrb[0].mxu0
  %v280 = vadd.f32 %v111, %v279
  %v281 = vpop.f32.mrb[0].mxu0
  %v282 = vpop.f32.mrb[0].mxu0
  %v283 = vadd.f32 %v116, %v282
  %v284 = vpop.f32.mrb[0].mxu0
  %285 = vmatprep.mubr.bf16.mxu0 0
  %286 = vmatmul.mubr.bf16.gmra.mrb[0].mxu0 %v191
  %v287 = vpop.f32.mrb[0].mxu0
  %v288 = vadd.f32 %v121, %v287
  %v289 = vpop.f32.mrb[0].mxu0
  %v290 = vpop.f32.mrb[0].mxu0
  %v291 = vadd.f32 %v126, %v290
  %v292 = vpop.f32.mrb[0].mxu0
  %293 = vdwg.mxu0
  %v294 = vpack.c.bf16 %v235, %v232
  %v295 = vpack.c.bf16 %v243, %v240
  %v296 = vpack.c.bf16 %v251, %v248
  %v297 = vpack.c.bf16 %v259, %v256
  %v298 = vpack.c.bf16 %v267, %v264
  %v299 = vpack.c.bf16 %v275, %v272
  %v300 = vpack.c.bf16 %v283, %v280
  %v301 = vpack.c.bf16 %v291, %v288
  %v310 = vunpack.c.l.b16 %v294
  %v311 = vunpack.c.h.b16 %v294
  %v312 = vunpack.c.l.b16 %v295
  %v313 = vunpack.c.h.b16 %v295
  %v314 = vunpack.c.l.b16 %v296
  %v315 = vunpack.c.h.b16 %v296
  %v316 = vunpack.c.l.b16 %v297
  %v317 = vunpack.c.h.b16 %v297
  %v318 = vunpack.c.l.b16 %v298
  %v319 = vunpack.c.h.b16 %v298
  %v320 = vunpack.c.l.b16 %v299
  %v321 = vunpack.c.h.b16 %v299
  %v322 = vunpack.c.l.b16 %v300
  %v323 = vunpack.c.h.b16 %v300
  %v324 = vunpack.c.l.b16 %v301
  %v325 = vunpack.c.h.b16 %v301
  %v326 = vpack.c.b16 %v310, %v310
  %v327 = vpack.c.b16 %v311, %v311
  %v328 = vpack.c.b16 %v312, %v312
  %v329 = vpack.c.b16 %v313, %v313
  %v330 = vpack.c.b16 %v314, %v314
  %v331 = vpack.c.b16 %v315, %v315
  %v332 = vpack.c.b16 %v316, %v316
  %v333 = vpack.c.b16 %v317, %v317
  %v334 = vpack.c.b16 %v318, %v318
  %v335 = vpack.c.b16 %v319, %v319
  %v336 = vpack.c.b16 %v320, %v320
  %v337 = vpack.c.b16 %v321, %v321
  %v338 = vpack.c.b16 %v322, %v322
  %v339 = vpack.c.b16 %v323, %v323
  %v340 = vpack.c.b16 %v324, %v324
  %v341 = vpack.c.b16 %v325, %v325
  %vm358 = vcmask 125952
  %359 = vst.msk [vmem:[%s3] sm:$0xf] %vm358, %v326
  %360 = vst.msk [vmem:[%s3 + $0x4] sm:$0xf] %vm358, %v327
  %361 = vst.msk [vmem:[%s3 + $0x8] sm:$0xf] %vm358, %v328
  %362 = vst.msk [vmem:[%s3 + $0xc] sm:$0xf] %vm358, %v329
  %363 = vst.msk [vmem:[%s3 + $0x10] sm:$0xf] %vm358, %v330
  %364 = vst.msk [vmem:[%s3 + $0x14] sm:$0xf] %vm358, %v331
  %365 = vst.msk [vmem:[%s3 + $0x18] sm:$0xf] %vm358, %v332
  %366 = vst.msk [vmem:[%s3 + $0x1c] sm:$0xf] %vm358, %v333
  %367 = vst.msk [vmem:[%s3 + $0x20] sm:$0xf] %vm358, %v334
  %368 = vst.msk [vmem:[%s3 + $0x24] sm:$0xf] %vm358, %v335
  %369 = vst.msk [vmem:[%s3 + $0x28] sm:$0xf] %vm358, %v336
  %370 = vst.msk [vmem:[%s3 + $0x2c] sm:$0xf] %vm358, %v337
  %371 = vst.msk [vmem:[%s3 + $0x30] sm:$0xf] %vm358, %v338
  %372 = vst.msk [vmem:[%s3 + $0x34] sm:$0xf] %vm358, %v339
  %373 = vst.msk [vmem:[%s3 + $0x38] sm:$0xf] %vm358, %v340
  %374 = vst.msk [vmem:[%s3 + $0x3c] sm:$0xf] %vm358, %v341
  // Predicated region
  $region14: #{up_conv2d_forward.6} parent=0 // pred_check
    _
  $region15: #{up_conv2d_forward.6} parent=0 // pred_check_branch
    %376 = sbr.rel (0) target = $region17
  $region16: #{up_conv2d_forward.6} parent=0 // pred_region
    _
  $region17: #{up_conv2d_forward.6} parent=0 // pred_fallthru
    _
  // Predicated region
  $region18: #{up_conv2d_forward.6} parent=0 // pred_check
    _
  $region19: #{up_conv2d_forward.6} parent=0 // pred_check_branch
    %378 = sbr.rel (0) target = $region21
  $region20: #{up_conv2d_forward.6} parent=0 // pred_region
    _
  $region21: #{up_conv2d_forward.6} parent=0 // pred_fallthru
    _

// kernel: up_conv2d_forward.7
$region0: #{up_conv2d_forward.7}
  #allocation0 [shape = 'u32[]', space=smem, size = 0x4, offset = 0x4, fixed_abs, tag = 'smem constant byte address 0x4 - core index']
  #allocation1 [shape = 'u32[144,128]{1,0:T(1,128)}', space=vmem, size = 0x12000, scoped, tag = 'internal scratch']
  #allocation2 [shape = 'bf16[144,384]{1,0:T(16,128)(2,1)}', space=vmem, size = 0x1b000, scoped, tag = 'scratch operand']
  #allocation3 [shape = 'bf16[16,422]{1,0:T(16,128)(2,1)}', space=vmem, size = 0x4000, scoped, tag = 'scratch operand']
  #allocation4 [shape = 'bf16[144,384]{1,0:T(16,128)(2,1)}', space=vmem, size = 0x1b000, scoped, tag = 'scratch operand']
  %s0 = inlined_call_operand.vmem [shape: bf16[2,16,422], index: 0, kind: input, shape index: {}]
  %s1 = inlined_call_operand.vmem [shape: bf16[16,144], index: 1, kind: input, shape index: {}]
  %s2 = inlined_call_operand.vmem [shape: f32[16,1], index: 2, kind: input, shape index: {}]
  %s3 = inlined_call_operand.vmem [shape: f32[16,1], index: 3, kind: input, shape index: {}]
  %s4 = inlined_call_operand.vmem [shape: bf16[16,144], index: 4, kind: input, shape index: {}]
  %s5 = inlined_call_operand.vmem [shape: f32[16,1], index: 5, kind: input, shape index: {}]
  %s6 = inlined_call_operand.vmem [shape: f32[16,1], index: 6, kind: input, shape index: {}]
  %s7 = inlined_call_operand.vmem [shape: f32[1,384], index: 7, kind: input, shape index: {}]
  %s8 = inlined_call_operand.vmem [shape: f32[2,16,384], index: 8, kind: output, shape index: {}]
  %s9 = sld [smem:[#allocation0]]
  $region65: #{up_conv2d_forward.7} parent=0
    _
  %s11 = ssub.s32 1, %s9
  %s12 = scalar_select 0, %s11, %s9
  loop: start=0, step=1, limit=4
  $region2: #{up_conv2d_forward.7} parent=0 // loop_pre_header
    _
  $region3: #{up_conv2d_forward.7} parent=0 // loop_header
    %s14 = sphi 0, %s18
    %p15 = scmp.ge.s32.totalorder %s14, 4
    %s24 = sphi 0, %s26
    %s27 = sphi 0, %s24
    %s28 = sphi 0, %s27
    %s44 = sphi 0, %s28
    %s48 = sphi 0, %s48
    %s50 = sphi 0, %s48
    %s51 = sphi 0, %s50
    %s65 = sphi 0, %s51
    %s69 = sphi 0, %s69
    %s71 = sphi 0, %s69
    %s72 = sphi 0, %s71
    %s86 = sphi 0, %s72
    %s90 = sphi 0, %s90
    %s92 = sphi 0, %s90
    %s93 = sphi 0, %s92
    %s107 = sphi 0, %s93
    %s111 = sphi 0, %s111
    %s113 = sphi 0, %s111
    %s114 = sphi 0, %s113
    %s128 = sphi 0, %s114
    %s132 = sphi 0, %s132
    %s134 = sphi 0, %s132
    %s135 = sphi 0, %s134
    %s149 = sphi 0, %s135
    %s153 = sphi 0, %s153
    %s155 = sphi 0, %s153
    %s156 = sphi 0, %s155
    %s170 = sphi 0, %s156
    %s174 = sphi 0, %s174
    %s176 = sphi 0, %s174
    %s177 = sphi 0, %s176
    %s191 = sphi 0, %s177
    %s197 = sphi 0, %s199
    %s200 = sphi 0, %s197
    %s201 = sphi 0, %s200
    %s217 = sphi 0, %s201
  $region4: #{up_conv2d_forward.7} parent=0 // loop_header_branch
    %17 = sbr.rel (%p15) target = $region8
  $region5: #{up_conv2d_forward.7} parent=0 // loop_body
    %s19 = ssub.s32 %s14, 1
    %s20 = ssub.s32 %s14, 2
    %s21 = sadd.s32 %s14, 1
    %s22 = ssub.s32 %s14, %s21
    %p23 = scmp.eq.s32.totalorder %s22, 0
    %s25 = sadd.s32 %s24, 1
    %s26 = scalar_select %p23, %s24, %s25
    %p29 = pneg %p23
    %p30 = scmp.eq.s32.totalorder %s14, 1
    %p31 = por %p29, %p30
    %p32 = scmp.ne.s32.totalorder %s24, %s27
    %p33 = scmp.eq.s32.totalorder %s14, 0
    %p34 = por %p32, %p33
    %p35 = scmp.ne.s32.totalorder %s24, %s27
    %p36 = scmp.eq.s32.totalorder %s19, 1
    %p37 = por %p35, %p36
    %p38 = scmp.ne.s32.totalorder %s27, %s28
    %p39 = scmp.eq.s32.totalorder %s19, 0
    %p40 = por %p38, %p39
    %p41 = scmp.ne.s32.totalorder %s27, %s28
    %p42 = scmp.eq.s32.totalorder %s20, 1
    %p43 = por %p41, %p42
    %p45 = scmp.ne.s32.totalorder %s28, %s44
    %p46 = scmp.eq.s32.totalorder %s20, 0
    %p47 = por %p45, %p46
    %s49 = sadd.s32 %s48, 1
    %p52 = scmp.eq.s32.totalorder %s14, 1
    %p53 = scmp.ne.s32.totalorder %s48, %s50
    %p54 = scmp.eq.s32.totalorder %s14, 0
    %p55 = por %p53, %p54
    %p56 = scmp.ne.s32.totalorder %s48, %s50
    %p57 = scmp.eq.s32.totalorder %s19, 1
    %p58 = por %p56, %p57
    %p59 = scmp.ne.s32.totalorder %s50, %s51
    %p60 = scmp.eq.s32.totalorder %s19, 0
    %p61 = por %p59, %p60
    %p62 = scmp.ne.s32.totalorder %s50, %s51
    %p63 = scmp.eq.s32.totalorder %s20, 1
    %p64 = por %p62, %p63
    %p66 = scmp.ne.s32.totalorder %s51, %s65
    %p67 = scmp.eq.s32.totalorder %s20, 0
    %p68 = por %p66, %p67
    %s70 = sadd.s32 %s69, 1
    %p73 = scmp.eq.s32.totalorder %s14, 1
    %p74 = scmp.ne.s32.totalorder %s69, %s71
    %p75 = scmp.eq.s32.totalorder %s14, 0
    %p76 = por %p74, %p75
    %p77 = scmp.ne.s32.totalorder %s69, %s71
    %p78 = scmp.eq.s32.totalorder %s19, 1
    %p79 = por %p77, %p78
    %p80 = scmp.ne.s32.totalorder %s71, %s72
    %p81 = scmp.eq.s32.totalorder %s19, 0
    %p82 = por %p80, %p81
    %p83 = scmp.ne.s32.totalorder %s71, %s72
    %p84 = scmp.eq.s32.totalorder %s20, 1
    %p85 = por %p83, %p84
    %p87 = scmp.ne.s32.totalorder %s72, %s86
    %p88 = scmp.eq.s32.totalorder %s20, 0
    %p89 = por %p87, %p88
    %s91 = sadd.s32 %s90, 1
    %p94 = scmp.eq.s32.totalorder %s14, 1
    %p95 = scmp.ne.s32.totalorder %s90, %s92
    %p96 = scmp.eq.s32.totalorder %s14, 0
    %p97 = por %p95, %p96
    %p98 = scmp.ne.s32.totalorder %s90, %s92
    %p99 = scmp.eq.s32.totalorder %s19, 1
    %p100 = por %p98, %p99
    %p101 = scmp.ne.s32.totalorder %s92, %s93
    %p102 = scmp.eq.s32.totalorder %s19, 0
    %p103 = por %p101, %p102
    %p104 = scmp.ne.s32.totalorder %s92, %s93
    %p105 = scmp.eq.s32.totalorder %s20, 1
    %p106 = por %p104, %p105
    %p108 = scmp.ne.s32.totalorder %s93, %s107
    %p109 = scmp.eq.s32.totalorder %s20, 0
    %p110 = por %p108, %p109
    %s112 = sadd.s32 %s111, 1
    %p115 = scmp.eq.s32.totalorder %s14, 1
    %p116 = scmp.ne.s32.totalorder %s111, %s113
    %p117 = scmp.eq.s32.totalorder %s14, 0
    %p118 = por %p116, %p117
    %p119 = scmp.ne.s32.totalorder %s111, %s113
    %p120 = scmp.eq.s32.totalorder %s19, 1
    %p121 = por %p119, %p120
    %p122 = scmp.ne.s32.totalorder %s113, %s114
    %p123 = scmp.eq.s32.totalorder %s19, 0
    %p124 = por %p122, %p123
    %p125 = scmp.ne.s32.totalorder %s113, %s114
    %p126 = scmp.eq.s32.totalorder %s20, 1
    %p127 = por %p125, %p126
    %p129 = scmp.ne.s32.totalorder %s114, %s128
    %p130 = scmp.eq.s32.totalorder %s20, 0
    %p131 = por %p129, %p130
    %s133 = sadd.s32 %s132, 1
    %p136 = scmp.eq.s32.totalorder %s14, 1
    %p137 = scmp.ne.s32.totalorder %s132, %s134
    %p138 = scmp.eq.s32.totalorder %s14, 0
    %p139 = por %p137, %p138
    %p140 = scmp.ne.s32.totalorder %s132, %s134
    %p141 = scmp.eq.s32.totalorder %s19, 1
    %p142 = por %p140, %p141
    %p143 = scmp.ne.s32.totalorder %s134, %s135
    %p144 = scmp.eq.s32.totalorder %s19, 0
    %p145 = por %p143, %p144
    %p146 = scmp.ne.s32.totalorder %s134, %s135
    %p147 = scmp.eq.s32.totalorder %s20, 1
    %p148 = por %p146, %p147
    %p150 = scmp.ne.s32.totalorder %s135, %s149
    %p151 = scmp.eq.s32.totalorder %s20, 0
    %p152 = por %p150, %p151
    %s154 = sadd.s32 %s153, 1
    %p157 = scmp.eq.s32.totalorder %s14, 1
    %p158 = scmp.ne.s32.totalorder %s153, %s155
    %p159 = scmp.eq.s32.totalorder %s14, 0
    %p160 = por %p158, %p159
    %p161 = scmp.ne.s32.totalorder %s153, %s155
    %p162 = scmp.eq.s32.totalorder %s19, 1
    %p163 = por %p161, %p162
    %p164 = scmp.ne.s32.totalorder %s155, %s156
    %p165 = scmp.eq.s32.totalorder %s19, 0
    %p166 = por %p164, %p165
    %p167 = scmp.ne.s32.totalorder %s155, %s156
    %p168 = scmp.eq.s32.totalorder %s20, 1
    %p169 = por %p167, %p168
    %p171 = scmp.ne.s32.totalorder %s156, %s170
    %p172 = scmp.eq.s32.totalorder %s20, 0
    %p173 = por %p171, %p172
    %s175 = sadd.s32 %s174, 1
    %p178 = scmp.eq.s32.totalorder %s14, 1
    %p179 = scmp.ne.s32.totalorder %s174, %s176
    %p180 = scmp.eq.s32.totalorder %s14, 0
    %p181 = por %p179, %p180
    %p182 = scmp.ne.s32.totalorder %s174, %s176
    %p183 = scmp.eq.s32.totalorder %s19, 1
    %p184 = por %p182, %p183
    %p185 = scmp.ne.s32.totalorder %s176, %s177
    %p186 = scmp.eq.s32.totalorder %s19, 0
    %p187 = por %p185, %p186
    %p188 = scmp.ne.s32.totalorder %s176, %s177
    %p189 = scmp.eq.s32.totalorder %s20, 1
    %p190 = por %p188, %p189
    %p192 = scmp.ne.s32.totalorder %s177, %s191
    %p193 = scmp.eq.s32.totalorder %s20, 0
    %p194 = por %p192, %p193
    %s195 = ssub.s32 %s14, %s21
    %p196 = scmp.eq.s32.totalorder %s195, 0
    %s198 = sadd.s32 %s197, 1
    %s199 = scalar_select %p196, %s197, %s198
    %p202 = pneg %p196
    %p203 = scmp.eq.s32.totalorder %s14, 1
    %p204 = por %p202, %p203
    %p205 = scmp.ne.s32.totalorder %s197, %s200
    %p206 = scmp.eq.s32.totalorder %s14, 0
    %p207 = por %p205, %p206
    %p208 = scmp.ne.s32.totalorder %s197, %s200
    %p209 = scmp.eq.s32.totalorder %s19, 1
    %p210 = por %p208, %p209
    %p211 = scmp.ne.s32.totalorder %s200, %s201
    %p212 = scmp.eq.s32.totalorder %s19, 0
    %p213 = por %p211, %p212
    %p214 = scmp.ne.s32.totalorder %s200, %s201
    %p215 = scmp.eq.s32.totalorder %s20, 1
    %p216 = por %p214, %p215
    %p218 = scmp.ne.s32.totalorder %s201, %s217
    %p219 = scmp.eq.s32.totalorder %s20, 0
    %p220 = por %p218, %p219
    %p221 = scmp.le.s32.totalorder 1, %s14
    %p222 = scmp.lt.s32.totalorder %s14, 3
    %p223 = pnand %p221, %p222
    %p224 = pneg %p223
    // Predicated region
    $region9: #{up_conv2d_forward.7} parent=5 // pred_check
      _
    $region10: #{up_conv2d_forward.7} parent=5 // pred_check_branch
      %226 = sbr.rel (%p223) target = $region12
    $region11: #{up_conv2d_forward.7} parent=5 // pred_region
      %s227 = ssub.s32 %s14, 1
      // Predicated region
      $region13: #{up_conv2d_forward.7} parent=11 // pred_check
        %p228 = pneg %p61
      $region14: #{up_conv2d_forward.7} parent=11 // pred_check_branch
        %230 = sbr.rel (%p228) target = $region16
      $region15: #{up_conv2d_forward.7} parent=11 // pred_region
        _
      $region16: #{up_conv2d_forward.7} parent=11 // pred_fallthru
        _
      // Predicated region
      $region17: #{up_conv2d_forward.7} parent=11 // pred_check
        %p231 = pneg %p82
      $region18: #{up_conv2d_forward.7} parent=11 // pred_check_branch
        %233 = sbr.rel (%p231) target = $region20
      $region19: #{up_conv2d_forward.7} parent=11 // pred_region
        _
      $region20: #{up_conv2d_forward.7} parent=11 // pred_fallthru
        _
      // Predicated region
      $region21: #{up_conv2d_forward.7} parent=11 // pred_check
        %p234 = pneg %p103
      $region22: #{up_conv2d_forward.7} parent=11 // pred_check_branch
        %236 = sbr.rel (%p234) target = $region24
      $region23: #{up_conv2d_forward.7} parent=11 // pred_region
        _
      $region24: #{up_conv2d_forward.7} parent=11 // pred_fallthru
        _
      // Predicated region
      $region25: #{up_conv2d_forward.7} parent=11 // pred_check
        %p237 = pneg %p124
      $region26: #{up_conv2d_forward.7} parent=11 // pred_check_branch
        %239 = sbr.rel (%p237) target = $region28
      $region27: #{up_conv2d_forward.7} parent=11 // pred_region
        _
      $region28: #{up_conv2d_forward.7} parent=11 // pred_fallthru
        _
      // Predicated region
      $region29: #{up_conv2d_forward.7} parent=11 // pred_check
        %p240 = pneg %p145
      $region30: #{up_conv2d_forward.7} parent=11 // pred_check_branch
        %242 = sbr.rel (%p240) target = $region32
      $region31: #{up_conv2d_forward.7} parent=11 // pred_region
        _
      $region32: #{up_conv2d_forward.7} parent=11 // pred_fallthru
        _
      // Predicated region
      $region33: #{up_conv2d_forward.7} parent=11 // pred_check
        %p243 = pneg %p166
      $region34: #{up_conv2d_forward.7} parent=11 // pred_check_branch
        %245 = sbr.rel (%p243) target = $region36
      $region35: #{up_conv2d_forward.7} parent=11 // pred_region
        _
      $region36: #{up_conv2d_forward.7} parent=11 // pred_fallthru
        _
      // Predicated region
      $region37: #{up_conv2d_forward.7} parent=11 // pred_check
        %p246 = pneg %p187
      $region38: #{up_conv2d_forward.7} parent=11 // pred_check_branch
        %248 = sbr.rel (%p246) target = $region40
      $region39: #{up_conv2d_forward.7} parent=11 // pred_region
        _
      $region40: #{up_conv2d_forward.7} parent=11 // pred_fallthru
        _
    $region12: #{up_conv2d_forward.7} parent=5 // pred_fallthru
      _
    %p249 = scmp.lt.s32.totalorder %s14, 2
    // Predicated region
    $region41: #{up_conv2d_forward.7} parent=5 // pred_check
      %p250 = pneg %p249
    $region42: #{up_conv2d_forward.7} parent=5 // pred_check_branch
      %252 = sbr.rel (%p250) target = $region44
    $region43: #{up_conv2d_forward.7} parent=5 // pred_region
      // Predicated region
      $region45: #{up_conv2d_forward.7} parent=43 // pred_check
        %p253 = pneg %p34
      $region46: #{up_conv2d_forward.7} parent=43 // pred_check_branch
        %255 = sbr.rel (%p253) target = $region48
      $region47: #{up_conv2d_forward.7} parent=43 // pred_region
        %p256 = scmp.lt.s32.totalorder %s14, 1
        %s257 = scalar_select %p256, %s14, 1
        %s258 = smul.addr %s257, 8
        %s259 = smul.addr %s258, 4
        %s260 = scalar_lea.vmem %s0, %s259
      $region48: #{up_conv2d_forward.7} parent=43 // pred_fallthru
        _
    $region44: #{up_conv2d_forward.7} parent=5 // pred_fallthru
      _
    %p261 = scmp.le.s32.totalorder 1, %s14
    %p262 = scmp.lt.s32.totalorder %s14, 3
    %p263 = pnand %p261, %p262
    %p264 = pneg %p263
    // Predicated region
    $region49: #{up_conv2d_forward.7} parent=5 // pred_check
      _
    $region50: #{up_conv2d_forward.7} parent=5 // pred_check_branch
      %266 = sbr.rel (%p263) target = $region52
    $region51: #{up_conv2d_forward.7} parent=5 // pred_region
      %s267 = ssub.s32 %s14, 1
      %p268 = scmp.lt.s32.totalorder %s19, 1
      %s269 = scalar_select %p268, %s19, 1
      %s270 = smul.addr %s269, 8
      %s271 = smul.addr %s270, 4
      %s272 = scalar_lea.vmem %s0, %s271
      %p273 = pneg %p40
      %p274 = pneg %p37
      %p275 = pneg %p61
      %p276 = pneg %p58
      %p277 = pneg %p82
      %p278 = pneg %p79
      %p279 = pneg %p103
      %p280 = pneg %p100
      %p281 = pneg %p124
      %p282 = pneg %p121
      %p283 = pneg %p145
      %p284 = pneg %p142
      %p285 = pneg %p166
      %p286 = pneg %p163
      %p287 = pneg %p187
      %p288 = pneg %p184
      %p289 = pneg %p213
      %p290 = pneg %p210
      %p291 = scmp.lt.s32.totalorder %s19, 1
      %s292 = scalar_select %p291, %s19, 1
      %s293 = smul.addr %s292, 6
      %s294 = smul.addr %s293, 8
      %s295 = scalar_lea.vmem %s8, %s294
      %p296 = scmp.lt.s32.totalorder %s19, 1
      %s297 = scalar_select %p296, %s19, 1
      %s298 = smul.addr %s297, 8
      %s299 = smul.addr %s298, 4
      %s300 = scalar_lea.vmem %s0, %s299
      %p301 = scmp.lt.s32.totalorder %s19, 1
      %s302 = scalar_select %p301, %s19, 1
      %s303 = smul.addr %s302, 6
      %s304 = smul.addr %s303, 8
      %s305 = scalar_lea.vmem %s8, %s304
      %v307 = vld [vmem:[%s300] sm:$0xff]
      %v308 = vld [vmem:[%s300 + $0x8] sm:$0xff]
      %v309 = vld [vmem:[%s300 + $0x10] sm:$0xff]
      %v310 = vld [vmem:[%s300 + $0x18] sm:$0xff]
      %v315 = vunpack.c.l.b16 %v307
      %v316 = vunpack.c.h.b16 %v307
      %v317 = vunpack.c.l.b16 %v308
      %v318 = vunpack.c.l.b16 %v309
      %v319 = vunpack.c.h.b16 %v309
      %v320 = vunpack.c.l.b16 %v310
      %v321 = vpack.c.b16 %v318, %v315
      %v322 = vpack.c.b16 %v319, %v316
      %v323 = vpack.c.b16 %v320, %v317
      %327 = vst [vmem:[#allocation2] sm:$0xff] %v321
      %328 = vst [vmem:[#allocation2 + $0x8] sm:$0xff] %v322
      %329 = vst [vmem:[#allocation2 + $0x10] sm:$0xff] %v323
      %v330 = vunpack.c.h.b16 %v308
      %v331 = vunpack.c.h.b16 %v310
      %v332 = vpack.c.b16 %v331, %v330
      %333 = vrot.lane.b32.xlu0 %v321, 127
      %v334 = vpop.permute.xlu0 %333
      %335 = vrot.lane.b32.xlu0 %v322, 127
      %v336 = vpop.permute.xlu0 %335
      %337 = vrot.lane.b32.xlu0 %v323, 127
      %v338 = vpop.permute.xlu0 %337
      %339 = vrot.lane.b32.xlu0 %v332, 127
      %v340 = vpop.permute.xlu0 %339
      %vm341 = vcmask 1039360
      %v342 = vsel %vm341, %v334, %v336
      %v343 = vsel %vm341, %v336, %v338
      %v344 = vsel %vm341, %v338, %v340
      %348 = vst [vmem:[#allocation2 + $0x18] sm:$0xff] %v342
      %349 = vst [vmem:[#allocation2 + $0x20] sm:$0xff] %v343
      %350 = vst [vmem:[#allocation2 + $0x28] sm:$0xff] %v344
      %351 = vrot.lane.b32.xlu0 %v321, 126
      %v352 = vpop.permute.xlu0 %351
      %353 = vrot.lane.b32.xlu0 %v322, 126
      %v354 = vpop.permute.xlu0 %353
      %355 = vrot.lane.b32.xlu0 %v323, 126
      %v356 = vpop.permute.xlu0 %355
      %357 = vrot.lane.b32.xlu0 %v332, 126
      %v358 = vpop.permute.xlu0 %357
      %vm359 = vcmask 1031168
      %v360 = vsel %vm359, %v352, %v354
      %v361 = vsel %vm359, %v354, %v356
      %v362 = vsel %vm359, %v356, %v358
      %366 = vst [vmem:[#allocation2 + $0x30] sm:$0xff] %v360
      %367 = vst [vmem:[#allocation2 + $0x38] sm:$0xff] %v361
      %368 = vst [vmem:[#allocation2 + $0x40] sm:$0xff] %v362
      %369 = vrot.lane.b32.xlu0 %v321, 110
      %v370 = vpop.permute.xlu0 %369
      %371 = vrot.lane.b32.xlu0 %v322, 110
      %v372 = vpop.permute.xlu0 %371
      %373 = vrot.lane.b32.xlu0 %v323, 110
      %v374 = vpop.permute.xlu0 %373
      %375 = vrot.lane.b32.xlu0 %v332, 110
      %v376 = vpop.permute.xlu0 %375
      %vm377 = vcmask 900096
      %v378 = vsel %vm377, %v370, %v372
      %v379 = vsel %vm377, %v372, %v374
      %v380 = vsel %vm377, %v374, %v376
      %384 = vst [vmem:[#allocation2 + $0x48] sm:$0xff] %v378
      %385 = vst [vmem:[#allocation2 + $0x50] sm:$0xff] %v379
      %386 = vst [vmem:[#allocation2 + $0x58] sm:$0xff] %v380
      %387 = vrot.lane.b32.xlu0 %v321, 109
      %v388 = vpop.permute.xlu0 %387
      %389 = vrot.lane.b32.xlu0 %v322, 109
      %v390 = vpop.permute.xlu0 %389
      %391 = vrot.lane.b32.xlu0 %v323, 109
      %v392 = vpop.permute.xlu0 %391
      %393 = vrot.lane.b32.xlu0 %v332, 109
      %v394 = vpop.permute.xlu0 %393
      %vm395 = vcmask 891904
      %v396 = vsel %vm395, %v388, %v390
      %v397 = vsel %vm395, %v390, %v392
      %v398 = vsel %vm395, %v392, %v394
      %402 = vst [vmem:[#allocation2 + $0x60] sm:$0xff] %v396
      %403 = vst [vmem:[#allocation2 + $0x68] sm:$0xff] %v397
      %404 = vst [vmem:[#allocation2 + $0x70] sm:$0xff] %v398
      %405 = vrot.lane.b32.xlu0 %v321, 108
      %v406 = vpop.permute.xlu0 %405
      %407 = vrot.lane.b32.xlu0 %v322, 108
      %v408 = vpop.permute.xlu0 %407
      %409 = vrot.lane.b32.xlu0 %v323, 108
      %v410 = vpop.permute.xlu0 %409
      %411 = vrot.lane.b32.xlu0 %v332, 108
      %v412 = vpop.permute.xlu0 %411
      %vm413 = vcmask 883712
      %v414 = vsel %vm413, %v406, %v408
      %v415 = vsel %vm413, %v408, %v410
      %v416 = vsel %vm413, %v410, %v412
      %420 = vst [vmem:[#allocation2 + $0x78] sm:$0xff] %v414
      %421 = vst [vmem:[#allocation2 + $0x80] sm:$0xff] %v415
      %422 = vst [vmem:[#allocation2 + $0x88] sm:$0xff] %v416
      %423 = vrot.lane.b32.xlu0 %v321, 92
      %v424 = vpop.permute.xlu0 %423
      %425 = vrot.lane.b32.xlu0 %v322, 92
      %v426 = vpop.permute.xlu0 %425
      %427 = vrot.lane.b32.xlu0 %v323, 92
      %v428 = vpop.permute.xlu0 %427
      %429 = vrot.lane.b32.xlu0 %v332, 92
      %v430 = vpop.permute.xlu0 %429
      %vm431 = vcmask 752640
      %v432 = vsel %vm431, %v424, %v426
      %v433 = vsel %vm431, %v426, %v428
      %v434 = vsel %vm431, %v428, %v430
      %438 = vst [vmem:[#allocation2 + $0x90] sm:$0xff] %v432
      %439 = vst [vmem:[#allocation2 + $0x98] sm:$0xff] %v433
      %440 = vst [vmem:[#allocation2 + $0xa0] sm:$0xff] %v434
      %441 = vrot.lane.b32.xlu0 %v321, 91
      %v442 = vpop.permute.xlu0 %441
      %443 = vrot.lane.b32.xlu0 %v322, 91
      %v444 = vpop.permute.xlu0 %443
      %445 = vrot.lane.b32.xlu0 %v323, 91
      %v446 = vpop.permute.xlu0 %445
      %447 = vrot.lane.b32.xlu0 %v332, 91
      %v448 = vpop.permute.xlu0 %447
      %vm449 = vcmask 744448
      %v450 = vsel %vm449, %v442, %v444
      %v451 = vsel %vm449, %v444, %v446
      %v452 = vsel %vm449, %v446, %v448
      %456 = vst [vmem:[#allocation2 + $0xa8] sm:$0xff] %v450
      %457 = vst [vmem:[#allocation2 + $0xb0] sm:$0xff] %v451
      %458 = vst [vmem:[#allocation2 + $0xb8] sm:$0xff] %v452
      %459 = vrot.lane.b32.xlu0 %v321, 90
      %v460 = vpop.permute.xlu0 %459
      %461 = vrot.lane.b32.xlu0 %v322, 90
      %v462 = vpop.permute.xlu0 %461
      %463 = vrot.lane.b32.xlu0 %v323, 90
      %v464 = vpop.permute.xlu0 %463
      %465 = vrot.lane.b32.xlu0 %v332, 90
      %v466 = vpop.permute.xlu0 %465
      %vm467 = vcmask 736256
      %v468 = vsel %vm467, %v460, %v462
      %v469 = vsel %vm467, %v462, %v464
      %v470 = vsel %vm467, %v464, %v466
      %474 = vst [vmem:[#allocation2 + $0xc0] sm:$0xff] %v468
      %475 = vst [vmem:[#allocation2 + $0xc8] sm:$0xff] %v469
      %476 = vst [vmem:[#allocation2 + $0xd0] sm:$0xff] %v470
      %v477 = vld [vmem:[%s1] sm:$0xff]
      %v478 = vld [vmem:[%s1 + $0x8] sm:$0xff]
      %v479 = vld [vmem:[#allocation2] sm:$0xff]
      %v480 = vld [vmem:[#allocation2 + $0x8] sm:$0xff]
      %v481 = vld [vmem:[#allocation2 + $0x10] sm:$0xff]
      %v482 = vld [vmem:[#allocation2 + $0x18] sm:$0xff]
      %v483 = vld [vmem:[#allocation2 + $0x20] sm:$0xff]
      %v484 = vld [vmem:[#allocation2 + $0x28] sm:$0xff]
      %v485 = vld [vmem:[#allocation2 + $0x30] sm:$0xff]
      %v486 = vld [vmem:[#allocation2 + $0x38] sm:$0xff]
      %v487 = vld [vmem:[#allocation2 + $0x40] sm:$0xff]
      %v488 = vld [vmem:[#allocation2 + $0x48] sm:$0xff]
      %v489 = vld [vmem:[#allocation2 + $0x50] sm:$0xff]
      %v490 = vld [vmem:[#allocation2 + $0x58] sm:$0xff]
      %v491 = vld [vmem:[#allocation2 + $0x60] sm:$0xff]
      %v492 = vld [vmem:[#allocation2 + $0x68] sm:$0xff]
      %v493 = vld [vmem:[#allocation2 + $0x70] sm:$0xff]
      %v494 = vld [vmem:[#allocation2 + $0x78] sm:$0xff]
      %v495 = vld [vmem:[#allocation2 + $0x80] sm:$0xff]
      %v496 = vld [vmem:[#allocation2 + $0x88] sm:$0xff]
      %v497 = vld [vmem:[#allocation2 + $0x90] sm:$0xff]
      %v498 = vld [vmem:[#allocation2 + $0x98] sm:$0xff]
      %v499 = vld [vmem:[#allocation2 + $0xa0] sm:$0xff]
      %v500 = vld [vmem:[#allocation2 + $0xa8] sm:$0xff]
      %v501 = vld [vmem:[#allocation2 + $0xb0] sm:$0xff]
      %v502 = vld [vmem:[#allocation2 + $0xb8] sm:$0xff]
      %v503 = vld [vmem:[#allocation2 + $0xc0] sm:$0xff]
      %v504 = vld [vmem:[#allocation2 + $0xc8] sm:$0xff]
      %v505 = vld [vmem:[#allocation2 + $0xd0] sm:$0xff]
      %v508 = vunpack.c.l.b16 %v477
      %v509 = vunpack.c.h.b16 %v477
      %v510 = vunpack.c.l.b16 %v478
      %v511 = vunpack.c.h.b16 %v478
      %v512 = vpack.c.b16 %v510, %v508
      %v513 = vpack.c.b16 %v511, %v509
      %vm515 = vcmask 130048
      %v517 = vsel %vm515, %v513, 0
      %519 = vmatprep.subr.bf16.mxu0 %v480
      %520 = vmatpush1.bf16.msra.mxu0 %v479
      %521 = vmatprep.subr.bf16.mxu0 %v483
      %522 = vmatpush1.bf16.msra.mxu0 %v482
      %523 = vmatprep.subr.bf16.mxu0 %v486
      %524 = vmatpush1.bf16.msra.mxu0 %v485
      %525 = vmatprep.subr.bf16.mxu0 %v489
      %526 = vmatpush1.bf16.msra.mxu0 %v488
      %527 = vmatprep.subr.bf16.mxu0 %v492
      %528 = vmatpush1.bf16.msra.mxu0 %v491
      %529 = vmatprep.subr.bf16.mxu0 %v495
      %530 = vmatpush1.bf16.msra.mxu0 %v494
      %531 = vmatprep.subr.bf16.mxu0 %v498
      %532 = vmatpush1.bf16.msra.mxu0 %v497
      %533 = vmatprep.subr.bf16.mxu0 %v501
      %534 = vmatpush1.bf16.msra.mxu0 %v500
      %535 = vmatprep.subr.bf16.mxu0 %v504
      %536 = vmatpush1.bf16.msra.mxu0 %v503
      %537 = vmatprep.subr.bf16.mxu0 0
      %538 = vmatpush1.bf16.msra.mxu0 0
      %539 = vmatprep.subr.bf16.mxu0 0
      %540 = vmatpush1.bf16.msra.mxu0 0
      %541 = vmatprep.subr.bf16.mxu0 0
      %542 = vmatpush1.bf16.msra.mxu0 0
      %543 = vmatprep.subr.bf16.mxu0 0
      %544 = vmatpush1.bf16.msra.mxu0 0
      %545 = vmatprep.subr.bf16.mxu0 0
      %546 = vmatpush1.bf16.msra.mxu0 0
      %547 = vmatprep.subr.bf16.mxu0 0
      %548 = vmatpush1.bf16.msra.mxu0 0
      %549 = vmatprep.subr.bf16.mxu0 0
      %550 = vmatpush1.bf16.msra.mxu0 0
      %551 = vmatprep.mubr.bf16.mxu0 %v517
      %552 = vmatmul.mubr.bf16.gmra.mrb[0].mxu0 %v512
      %v553 = vpop.f32.mrb[0].mxu0
      %v554 = vadd.f32 0.0, %v553
      %v555 = vpop.f32.mrb[0].mxu0
      %v556 = vadd.f32 0.0, %v555
      %v557 = vpop.f32.mrb[0].mxu0
      %v558 = vadd.f32 0.0, %v557
      %v559 = vpop.f32.mrb[0].mxu0
      %v560 = vadd.f32 0.0, %v559
      %561 = vdwg.mxu0
      %562 = vmatprep.subr.bf16.mxu0 0
      %563 = vmatpush1.bf16.msra.mxu0 %v481
      %564 = vmatprep.subr.bf16.mxu0 0
      %565 = vmatpush1.bf16.msra.mxu0 %v484
      %566 = vmatprep.subr.bf16.mxu0 0
      %567 = vmatpush1.bf16.msra.mxu0 %v487
      %568 = vmatprep.subr.bf16.mxu0 0
      %569 = vmatpush1.bf16.msra.mxu0 %v490
      %570 = vmatprep.subr.bf16.mxu0 0
      %571 = vmatpush1.bf16.msra.mxu0 %v493
      %572 = vmatprep.subr.bf16.mxu0 0
      %573 = vmatpush1.bf16.msra.mxu0 %v496
      %574 = vmatprep.subr.bf16.mxu0 0
      %575 = vmatpush1.bf16.msra.mxu0 %v499
      %576 = vmatprep.subr.bf16.mxu0 0
      %577 = vmatpush1.bf16.msra.mxu0 %v502
      %578 = vmatprep.subr.bf16.mxu0 0
      %579 = vmatpush1.bf16.msra.mxu0 %v505
      %580 = vmatprep.subr.bf16.mxu0 0
      %581 = vmatpush1.bf16.msra.mxu0 0
      %582 = vmatprep.subr.bf16.mxu0 0
      %583 = vmatpush1.bf16.msra.mxu0 0
      %584 = vmatprep.subr.bf16.mxu0 0
      %585 = vmatpush1.bf16.msra.mxu0 0
      %586 = vmatprep.subr.bf16.mxu0 0
      %587 = vmatpush1.bf16.msra.mxu0 0
      %588 = vmatprep.subr.bf16.mxu0 0
      %589 = vmatpush1.bf16.msra.mxu0 0
      %590 = vmatprep.subr.bf16.mxu0 0
      %591 = vmatpush1.bf16.msra.mxu0 0
      %592 = vmatprep.subr.bf16.mxu0 0
      %593 = vmatpush1.bf16.msra.mxu0 0
      %594 = vmatprep.mubr.bf16.mxu0 %v517
      %595 = vmatmul.mubr.bf16.gmra.mrb[0].mxu0 %v512
      %v596 = vpop.f32.mrb[0].mxu0
      %v597 = vadd.f32 0.0, %v596
      %v598 = vpop.f32.mrb[0].mxu0
      %v599 = vpop.f32.mrb[0].mxu0
      %v600 = vadd.f32 0.0, %v599
      %v601 = vpop.f32.mrb[0].mxu0
      %602 = vdwg.mxu0
      %v603 = vld [vmem:[%s2] sm:$0xff]
      %v604 = vld [vmem:[%s2 + $0x8] sm:$0xff]
      %606 = vset.pattern.permute.xlu0 0
      %607 = vperm.xlu0 %606, %v603
      %v608 = vpop.permute.xlu0 %607
      %611 = vset.pattern.permute.xlu0 0
      %612 = vperm.xlu0 %611, %v604
      %v613 = vpop.permute.xlu0 %612
      %v615 = vmul.f32 %v554, %v608
      %v616 = vmul.f32 %v556, %v608
      %v617 = vmul.f32 %v597, %v608
      %v618 = vmul.f32 %v558, %v613
      %v619 = vmul.f32 %v560, %v613
      %v620 = vmul.f32 %v600, %v613
      %v621 = vld [vmem:[%s3] sm:$0xff]
      %v622 = vld [vmem:[%s3 + $0x8] sm:$0xff]
      %624 = vset.pattern.permute.xlu0 0
      %625 = vperm.xlu0 %624, %v621
      %v626 = vpop.permute.xlu0 %625
      %629 = vset.pattern.permute.xlu0 0
      %630 = vperm.xlu0 %629, %v622
      %v631 = vpop.permute.xlu0 %630
      %v633 = vadd.f32 %v615, %v626
      %v634 = vadd.f32 %v616, %v626
      %v635 = vadd.f32 %v617, %v626
      %v636 = vadd.f32 %v618, %v631
      %v637 = vadd.f32 %v619, %v631
      %v638 = vadd.f32 %v620, %v631
      %v639 = vmax.f32 %v633, 0.0
      %v640 = vmax.f32 %v634, 0.0
      %v641 = vmax.f32 %v635, 0.0
      %v642 = vmax.f32 %v636, 0.0
      %v643 = vmax.f32 %v637, 0.0
      %v644 = vmax.f32 %v638, 0.0
      %v645 = vld [vmem:[%s7] sm:$0x7]
      %v647 = vlaneseq
      %v648 = vshrl.u32 %v647, 7
      %v649 = vsub.s32 0, %v648
      %v650 = vrot.slane %v645, %v649
      %v651 = vlaneseq
      %v652 = vshrl.u32 %v651, 7
      %v653 = vsub.s32 1, %v652
      %v654 = vrot.slane %v645, %v653
      %v655 = vlaneseq
      %v656 = vshrl.u32 %v655, 7
      %v657 = vsub.s32 2, %v656
      %v658 = vrot.slane %v645, %v657
      %v662 = vmul.f32 %v639, %v650
      %v663 = vmul.f32 %v640, %v654
      %v664 = vmul.f32 %v641, %v658
      %v665 = vmul.f32 %v642, %v650
      %v666 = vmul.f32 %v643, %v654
      %v667 = vmul.f32 %v644, %v658
      %vm668 = vcmask 154624
      %669 = vst.msk [vmem:[#allocation3] sm:$0xff] %vm668, 0
      %vm670 = vcmask 310424
      %671 = vst.msk [vmem:[#allocation3 + $0x18] sm:$0xff] %vm670, 0
      %v672 = vpack.c.bf16 %v665, %v662
      %v673 = vpack.c.bf16 %v666, %v663
      %v674 = vpack.c.bf16 %v667, %v664
      %678 = vrot.lane.b32.xlu0 %v672, 19
      %v679 = vpop.permute.xlu0 %678
      %680 = vrot.lane.b32.xlu0 %v673, 19
      %v681 = vpop.permute.xlu0 %680
      %682 = vrot.lane.b32.xlu0 %v674, 19
      %v683 = vpop.permute.xlu0 %682
      %vm684 = vcmask 154624
      %v685 = vsel %vm684, %v679, %v681
      %v686 = vsel %vm684, %v681, %v683
      %vm691 = vcmask 1047704
      %692 = vst.msk [vmem:[#allocation3] sm:$0xff] %vm691, %v679
      %693 = vst [vmem:[#allocation3 + $0x8] sm:$0xff] %v685
      %694 = vst [vmem:[#allocation3 + $0x10] sm:$0xff] %v686
      %695 = vst.msk [vmem:[#allocation3 + $0x18] sm:$0xff] %vm668, %v683
      %v696 = vld [vmem:[#allocation3] sm:$0xff]
      %v697 = vld [vmem:[#allocation3 + $0x8] sm:$0xff]
      %v698 = vld [vmem:[#allocation3 + $0x10] sm:$0xff]
      %699 = vst [vmem:[#allocation4] sm:$0xff] %v696
      %700 = vst [vmem:[#allocation4 + $0x8] sm:$0xff] %v697
      %701 = vst [vmem:[#allocation4 + $0x10] sm:$0xff] %v698
      %v702 = vld [vmem:[#allocation3] sm:$0xff]
      %v703 = vld [vmem:[#allocation3 + $0x8] sm:$0xff]
      %v704 = vld [vmem:[#allocation3 + $0x10] sm:$0xff]
      %v705 = vld [vmem:[#allocation3 + $0x18] sm:$0xff]
      %710 = vrot.lane.b32.xlu0 %v702, 127
      %v711 = vpop.permute.xlu0 %710
      %712 = vrot.lane.b32.xlu0 %v703, 127
      %v713 = vpop.permute.xlu0 %712
      %714 = vrot.lane.b32.xlu0 %v704, 127
      %v715 = vpop.permute.xlu0 %714
      %716 = vrot.lane.b32.xlu0 %v705, 127
      %v717 = vpop.permute.xlu0 %716
      %v718 = vsel %vm341, %v711, %v713
      %v719 = vsel %vm341, %v713, %v715
      %v720 = vsel %vm341, %v715, %v717
      %724 = vst [vmem:[#allocation4 + $0x18] sm:$0xff] %v718
      %725 = vst [vmem:[#allocation4 + $0x20] sm:$0xff] %v719
      %726 = vst [vmem:[#allocation4 + $0x28] sm:$0xff] %v720
      %v727 = vld [vmem:[#allocation3] sm:$0xff]
      %v728 = vld [vmem:[#allocation3 + $0x8] sm:$0xff]
      %v729 = vld [vmem:[#allocation3 + $0x10] sm:$0xff]
      %v730 = vld [vmem:[#allocation3 + $0x18] sm:$0xff]
      %735 = vrot.lane.b32.xlu0 %v727, 126
      %v736 = vpop.permute.xlu0 %735
      %737 = vrot.lane.b32.xlu0 %v728, 126
      %v738 = vpop.permute.xlu0 %737
      %739 = vrot.lane.b32.xlu0 %v729, 126
      %v740 = vpop.permute.xlu0 %739
      %741 = vrot.lane.b32.xlu0 %v730, 126
      %v742 = vpop.permute.xlu0 %741
      %v743 = vsel %vm359, %v736, %v738
      %v744 = vsel %vm359, %v738, %v740
      %v745 = vsel %vm359, %v740, %v742
      %749 = vst [vmem:[#allocation4 + $0x30] sm:$0xff] %v743
      %750 = vst [vmem:[#allocation4 + $0x38] sm:$0xff] %v744
      %751 = vst [vmem:[#allocation4 + $0x40] sm:$0xff] %v745
      %v752 = vld [vmem:[#allocation3] sm:$0xff]
      %v753 = vld [vmem:[#allocation3 + $0x8] sm:$0xff]
      %v754 = vld [vmem:[#allocation3 + $0x10] sm:$0xff]
      %v755 = vld [vmem:[#allocation3 + $0x18] sm:$0xff]
      %760 = vrot.lane.b32.xlu0 %v752, 110
      %v761 = vpop.permute.xlu0 %760
      %762 = vrot.lane.b32.xlu0 %v753, 110
      %v763 = vpop.permute.xlu0 %762
      %764 = vrot.lane.b32.xlu0 %v754, 110
      %v765 = vpop.permute.xlu0 %764
      %766 = vrot.lane.b32.xlu0 %v755, 110
      %v767 = vpop.permute.xlu0 %766
      %v768 = vsel %vm377, %v761, %v763
      %v769 = vsel %vm377, %v763, %v765
      %v770 = vsel %vm377, %v765, %v767
      %774 = vst [vmem:[#allocation4 + $0x48] sm:$0xff] %v768
      %775 = vst [vmem:[#allocation4 + $0x50] sm:$0xff] %v769
      %776 = vst [vmem:[#allocation4 + $0x58] sm:$0xff] %v770
      %v777 = vld [vmem:[#allocation3] sm:$0xff]
      %v778 = vld [vmem:[#allocation3 + $0x8] sm:$0xff]
      %v779 = vld [vmem:[#allocation3 + $0x10] sm:$0xff]
      %v780 = vld [vmem:[#allocation3 + $0x18] sm:$0xff]
      %785 = vrot.lane.b32.xlu0 %v777, 109
      %v786 = vpop.permute.xlu0 %785
      %787 = vrot.lane.b32.xlu0 %v778, 109
      %v788 = vpop.permute.xlu0 %787
      %789 = vrot.lane.b32.xlu0 %v779, 109
      %v790 = vpop.permute.xlu0 %789
      %791 = vrot.lane.b32.xlu0 %v780, 109
      %v792 = vpop.permute.xlu0 %791
      %v793 = vsel %vm395, %v786, %v788
      %v794 = vsel %vm395, %v788, %v790
      %v795 = vsel %vm395, %v790, %v792
      %799 = vst [vmem:[#allocation4 + $0x60] sm:$0xff] %v793
      %800 = vst [vmem:[#allocation4 + $0x68] sm:$0xff] %v794
      %801 = vst [vmem:[#allocation4 + $0x70] sm:$0xff] %v795
      %v802 = vld [vmem:[#allocation3] sm:$0xff]
      %v803 = vld [vmem:[#allocation3 + $0x8] sm:$0xff]
      %v804 = vld [vmem:[#allocation3 + $0x10] sm:$0xff]
      %v805 = vld [vmem:[#allocation3 + $0x18] sm:$0xff]
      %810 = vrot.lane.b32.xlu0 %v802, 108
      %v811 = vpop.permute.xlu0 %810
      %812 = vrot.lane.b32.xlu0 %v803, 108
      %v813 = vpop.permute.xlu0 %812
      %814 = vrot.lane.b32.xlu0 %v804, 108
      %v815 = vpop.permute.xlu0 %814
      %816 = vrot.lane.b32.xlu0 %v805, 108
      %v817 = vpop.permute.xlu0 %816
      %v818 = vsel %vm413, %v811, %v813
      %v819 = vsel %vm413, %v813, %v815
      %v820 = vsel %vm413, %v815, %v817
      %824 = vst [vmem:[#allocation4 + $0x78] sm:$0xff] %v818
      %825 = vst [vmem:[#allocation4 + $0x80] sm:$0xff] %v819
      %826 = vst [vmem:[#allocation4 + $0x88] sm:$0xff] %v820
      %v827 = vld [vmem:[#allocation3] sm:$0xff]
      %v828 = vld [vmem:[#allocation3 + $0x8] sm:$0xff]
      %v829 = vld [vmem:[#allocation3 + $0x10] sm:$0xff]
      %v830 = vld [vmem:[#allocation3 + $0x18] sm:$0xff]
      %835 = vrot.lane.b32.xlu0 %v827, 92
      %v836 = vpop.permute.xlu0 %835
      %837 = vrot.lane.b32.xlu0 %v828, 92
      %v838 = vpop.permute.xlu0 %837
      %839 = vrot.lane.b32.xlu0 %v829, 92
      %v840 = vpop.permute.xlu0 %839
      %841 = vrot.lane.b32.xlu0 %v830, 92
      %v842 = vpop.permute.xlu0 %841
      %v843 = vsel %vm431, %v836, %v838
      %v844 = vsel %vm431, %v838, %v840
      %v845 = vsel %vm431, %v840, %v842
      %849 = vst [vmem:[#allocation4 + $0x90] sm:$0xff] %v843
      %850 = vst [vmem:[#allocation4 + $0x98] sm:$0xff] %v844
      %851 = vst [vmem:[#allocation4 + $0xa0] sm:$0xff] %v845
      %v852 = vld [vmem:[#allocation3] sm:$0xff]
      %v853 = vld [vmem:[#allocation3 + $0x8] sm:$0xff]
      %v854 = vld [vmem:[#allocation3 + $0x10] sm:$0xff]
      %v855 = vld [vmem:[#allocation3 + $0x18] sm:$0xff]
      %860 = vrot.lane.b32.xlu0 %v852, 91
      %v861 = vpop.permute.xlu0 %860
      %862 = vrot.lane.b32.xlu0 %v853, 91
      %v863 = vpop.permute.xlu0 %862
      %864 = vrot.lane.b32.xlu0 %v854, 91
      %v865 = vpop.permute.xlu0 %864
      %866 = vrot.lane.b32.xlu0 %v855, 91
      %v867 = vpop.permute.xlu0 %866
      %v868 = vsel %vm449, %v861, %v863
      %v869 = vsel %vm449, %v863, %v865
      %v870 = vsel %vm449, %v865, %v867
      %874 = vst [vmem:[#allocation4 + $0xa8] sm:$0xff] %v868
      %875 = vst [vmem:[#allocation4 + $0xb0] sm:$0xff] %v869
      %876 = vst [vmem:[#allocation4 + $0xb8] sm:$0xff] %v870
      %v877 = vld [vmem:[#allocation3] sm:$0xff]
      %v878 = vld [vmem:[#allocation3 + $0x8] sm:$0xff]
      %v879 = vld [vmem:[#allocation3 + $0x10] sm:$0xff]
      %v880 = vld [vmem:[#allocation3 + $0x18] sm:$0xff]
      %885 = vrot.lane.b32.xlu0 %v877, 90
      %v886 = vpop.permute.xlu0 %885
      %887 = vrot.lane.b32.xlu0 %v878, 90
      %v888 = vpop.permute.xlu0 %887
      %889 = vrot.lane.b32.xlu0 %v879, 90
      %v890 = vpop.permute.xlu0 %889
      %891 = vrot.lane.b32.xlu0 %v880, 90
      %v892 = vpop.permute.xlu0 %891
      %v893 = vsel %vm467, %v886, %v888
      %v894 = vsel %vm467, %v888, %v890
      %v895 = vsel %vm467, %v890, %v892
      %899 = vst [vmem:[#allocation4 + $0xc0] sm:$0xff] %v893
      %900 = vst [vmem:[#allocation4 + $0xc8] sm:$0xff] %v894
      %901 = vst [vmem:[#allocation4 + $0xd0] sm:$0xff] %v895
      %v902 = vld [vmem:[%s4] sm:$0xff]
      %v903 = vld [vmem:[%s4 + $0x8] sm:$0xff]
      %v904 = vld [vmem:[#allocation4] sm:$0xff]
      %v905 = vld [vmem:[#allocation4 + $0x8] sm:$0xff]
      %v906 = vld [vmem:[#allocation4 + $0x10] sm:$0xff]
      %v907 = vld [vmem:[#allocation4 + $0x18] sm:$0xff]
      %v908 = vld [vmem:[#allocation4 + $0x20] sm:$0xff]
      %v909 = vld [vmem:[#allocation4 + $0x28] sm:$0xff]
      %v910 = vld [vmem:[#allocation4 + $0x30] sm:$0xff]
      %v911 = vld [vmem:[#allocation4 + $0x38] sm:$0xff]
      %v912 = vld [vmem:[#allocation4 + $0x40] sm:$0xff]
      %v913 = vld [vmem:[#allocation4 + $0x48] sm:$0xff]
      %v914 = vld [vmem:[#allocation4 + $0x50] sm:$0xff]
      %v915 = vld [vmem:[#allocation4 + $0x58] sm:$0xff]
      %v916 = vld [vmem:[#allocation4 + $0x60] sm:$0xff]
      %v917 = vld [vmem:[#allocation4 + $0x68] sm:$0xff]
      %v918 = vld [vmem:[#allocation4 + $0x70] sm:$0xff]
      %v919 = vld [vmem:[#allocation4 + $0x78] sm:$0xff]
      %v920 = vld [vmem:[#allocation4 + $0x80] sm:$0xff]
      %v921 = vld [vmem:[#allocation4 + $0x88] sm:$0xff]
      %v922 = vld [vmem:[#allocation4 + $0x90] sm:$0xff]
      %v923 = vld [vmem:[#allocation4 + $0x98] sm:$0xff]
      %v924 = vld [vmem:[#allocation4 + $0xa0] sm:$0xff]
      %v925 = vld [vmem:[#allocation4 + $0xa8] sm:$0xff]
      %v926 = vld [vmem:[#allocation4 + $0xb0] sm:$0xff]
      %v927 = vld [vmem:[#allocation4 + $0xb8] sm:$0xff]
      %v928 = vld [vmem:[#allocation4 + $0xc0] sm:$0xff]
      %v929 = vld [vmem:[#allocation4 + $0xc8] sm:$0xff]
      %v930 = vld [vmem:[#allocation4 + $0xd0] sm:$0xff]
      %v933 = vunpack.c.l.b16 %v902
      %v934 = vunpack.c.h.b16 %v902
      %v935 = vunpack.c.l.b16 %v903
      %v936 = vunpack.c.h.b16 %v903
      %v937 = vpack.c.b16 %v935, %v933
      %v938 = vpack.c.b16 %v936, %v934
      %v941 = vsel %vm515, %v938, 0
      %943 = vmatprep.subr.bf16.mxu0 %v905
      %944 = vmatpush1.bf16.msra.mxu0 %v904
      %945 = vmatprep.subr.bf16.mxu0 %v908
      %946 = vmatpush1.bf16.msra.mxu0 %v907
      %947 = vmatprep.subr.bf16.mxu0 %v911
      %948 = vmatpush1.bf16.msra.mxu0 %v910
      %949 = vmatprep.subr.bf16.mxu0 %v914
      %950 = vmatpush1.bf16.msra.mxu0 %v913
      %951 = vmatprep.subr.bf16.mxu0 %v917
      %952 = vmatpush1.bf16.msra.mxu0 %v916
      %953 = vmatprep.subr.bf16.mxu0 %v920
      %954 = vmatpush1.bf16.msra.mxu0 %v919
      %955 = vmatprep.subr.bf16.mxu0 %v923
      %956 = vmatpush1.bf16.msra.mxu0 %v922
      %957 = vmatprep.subr.bf16.mxu0 %v926
      %958 = vmatpush1.bf16.msra.mxu0 %v925
      %959 = vmatprep.subr.bf16.mxu0 %v929
      %960 = vmatpush1.bf16.msra.mxu0 %v928
      %961 = vmatprep.subr.bf16.mxu0 0
      %962 = vmatpush1.bf16.msra.mxu0 0
      %963 = vmatprep.subr.bf16.mxu0 0
      %964 = vmatpush1.bf16.msra.mxu0 0
      %965 = vmatprep.subr.bf16.mxu0 0
      %966 = vmatpush1.bf16.msra.mxu0 0
      %967 = vmatprep.subr.bf16.mxu0 0
      %968 = vmatpush1.bf16.msra.mxu0 0
      %969 = vmatprep.subr.bf16.mxu0 0
      %970 = vmatpush1.bf16.msra.mxu0 0
      %971 = vmatprep.subr.bf16.mxu0 0
      %972 = vmatpush1.bf16.msra.mxu0 0
      %973 = vmatprep.subr.bf16.mxu0 0
      %974 = vmatpush1.bf16.msra.mxu0 0
      %975 = vmatprep.mubr.bf16.mxu0 %v941
      %976 = vmatmul.mubr.bf16.gmra.mrb[0].mxu0 %v937
      %v977 = vpop.f32.mrb[0].mxu0
      %v978 = vadd.f32 0.0, %v977
      %v979 = vpop.f32.mrb[0].mxu0
      %v980 = vadd.f32 0.0, %v979
      %v981 = vpop.f32.mrb[0].mxu0
      %v982 = vadd.f32 0.0, %v981
      %v983 = vpop.f32.mrb[0].mxu0
      %v984 = vadd.f32 0.0, %v983
      %985 = vdwg.mxu0
      %986 = vmatprep.subr.bf16.mxu0 0
      %987 = vmatpush1.bf16.msra.mxu0 %v906
      %988 = vmatprep.subr.bf16.mxu0 0
      %989 = vmatpush1.bf16.msra.mxu0 %v909
      %990 = vmatprep.subr.bf16.mxu0 0
      %991 = vmatpush1.bf16.msra.mxu0 %v912
      %992 = vmatprep.subr.bf16.mxu0 0
      %993 = vmatpush1.bf16.msra.mxu0 %v915
      %994 = vmatprep.subr.bf16.mxu0 0
      %995 = vmatpush1.bf16.msra.mxu0 %v918
      %996 = vmatprep.subr.bf16.mxu0 0
      %997 = vmatpush1.bf16.msra.mxu0 %v921
      %998 = vmatprep.subr.bf16.mxu0 0
      %999 = vmatpush1.bf16.msra.mxu0 %v924
      %1000 = vmatprep.subr.bf16.mxu0 0
      %1001 = vmatpush1.bf16.msra.mxu0 %v927
      %1002 = vmatprep.subr.bf16.mxu0 0
      %1003 = vmatpush1.bf16.msra.mxu0 %v930
      %1004 = vmatprep.subr.bf16.mxu0 0
      %1005 = vmatpush1.bf16.msra.mxu0 0
      %1006 = vmatprep.subr.bf16.mxu0 0
      %1007 = vmatpush1.bf16.msra.mxu0 0
      %1008 = vmatprep.subr.bf16.mxu0 0
      %1009 = vmatpush1.bf16.msra.mxu0 0
      %1010 = vmatprep.subr.bf16.mxu0 0
      %1011 = vmatpush1.bf16.msra.mxu0 0
      %1012 = vmatprep.subr.bf16.mxu0 0
      %1013 = vmatpush1.bf16.msra.mxu0 0
      %1014 = vmatprep.subr.bf16.mxu0 0
      %1015 = vmatpush1.bf16.msra.mxu0 0
      %1016 = vmatprep.subr.bf16.mxu0 0
      %1017 = vmatpush1.bf16.msra.mxu0 0
      %1018 = vmatprep.mubr.bf16.mxu0 %v941
      %1019 = vmatmul.mubr.bf16.gmra.mrb[0].mxu0 %v937
      %v1020 = vpop.f32.mrb[0].mxu0
      %v1021 = vadd.f32 0.0, %v1020
      %v1022 = vpop.f32.mrb[0].mxu0
      %v1023 = vpop.f32.mrb[0].mxu0
      %v1024 = vadd.f32 0.0, %v1023
      %v1025 = vpop.f32.mrb[0].mxu0
      %1026 = vdwg.mxu0
      %v1027 = vld [vmem:[%s5] sm:$0xff]
      %v1028 = vld [vmem:[%s5 + $0x8] sm:$0xff]
      %1030 = vset.pattern.permute.xlu0 0
      %1031 = vperm.xlu0 %1030, %v1027
      %v1032 = vpop.permute.xlu0 %1031
      %1035 = vset.pattern.permute.xlu0 0
      %1036 = vperm.xlu0 %1035, %v1028
      %v1037 = vpop.permute.xlu0 %1036
      %v1039 = vmul.f32 %v978, %v1032
      %v1040 = vmul.f32 %v980, %v1032
      %v1041 = vmul.f32 %v1021, %v1032
      %v1042 = vmul.f32 %v982, %v1037
      %v1043 = vmul.f32 %v984, %v1037
      %v1044 = vmul.f32 %v1024, %v1037
      %v1045 = vld [vmem:[%s6] sm:$0xff]
      %v1046 = vld [vmem:[%s6 + $0x8] sm:$0xff]
      %1048 = vset.pattern.permute.xlu0 0
      %1049 = vperm.xlu0 %1048, %v1045
      %v1050 = vpop.permute.xlu0 %1049
      %1053 = vset.pattern.permute.xlu0 0
      %1054 = vperm.xlu0 %1053, %v1046
      %v1055 = vpop.permute.xlu0 %1054
      %v1057 = vadd.f32 %v1039, %v1050
      %v1058 = vadd.f32 %v1040, %v1050
      %v1059 = vadd.f32 %v1041, %v1050
      %v1060 = vadd.f32 %v1042, %v1055
      %v1061 = vadd.f32 %v1043, %v1055
      %v1062 = vadd.f32 %v1044, %v1055
      %v1063 = vmax.f32 %v1057, 0.0
      %v1064 = vmax.f32 %v1058, 0.0
      %v1065 = vmax.f32 %v1059, 0.0
      %v1066 = vmax.f32 %v1060, 0.0
      %v1067 = vmax.f32 %v1061, 0.0
      %v1068 = vmax.f32 %v1062, 0.0
      %1069 = vst [vmem:[%s305] sm:$0xff] %v1063
      %1070 = vst [vmem:[%s305 + $0x8] sm:$0xff] %v1064
      %1071 = vst [vmem:[%s305 + $0x10] sm:$0xff] %v1065
      %1072 = vst [vmem:[%s305 + $0x18] sm:$0xff] %v1066
      %1073 = vst [vmem:[%s305 + $0x20] sm:$0xff] %v1067
      %1074 = vst [vmem:[%s305 + $0x28] sm:$0xff] %v1068
      %p1075 = scmp.lt.s32.totalorder %s19, 1
      %s1076 = scalar_select %p1075, %s19, 1
      %s1077 = smul.addr %s1076, 6
      %s1078 = smul.addr %s1077, 8
      %s1079 = scalar_lea.vmem %s8, %s1078
      // Predicated region
      $region53: #{up_conv2d_forward.7} parent=51 // pred_check
        %p1080 = pneg %p210
      $region54: #{up_conv2d_forward.7} parent=51 // pred_check_branch
        %1082 = sbr.rel (%p1080) target = $region56
      $region55: #{up_conv2d_forward.7} parent=51 // pred_region
        _
      $region56: #{up_conv2d_forward.7} parent=51 // pred_fallthru
        _
    $region52: #{up_conv2d_forward.7} parent=5 // pred_fallthru
      _
    %p1083 = scmp.le.s32.totalorder 2, %s14
    // Predicated region
    $region57: #{up_conv2d_forward.7} parent=5 // pred_check
      %p1084 = pneg %p1083
    $region58: #{up_conv2d_forward.7} parent=5 // pred_check_branch
      %1086 = sbr.rel (%p1084) target = $region60
    $region59: #{up_conv2d_forward.7} parent=5 // pred_region
      %s1087 = ssub.s32 %s14, 2
      // Predicated region
      $region61: #{up_conv2d_forward.7} parent=59 // pred_check
        %p1088 = pneg %p216
      $region62: #{up_conv2d_forward.7} parent=59 // pred_check_branch
        %1090 = sbr.rel (%p1088) target = $region64
      $region63: #{up_conv2d_forward.7} parent=59 // pred_region
        %p1091 = scmp.lt.s32.totalorder %s20, 1
        %s1092 = scalar_select %p1091, %s20, 1
        %s1093 = smul.addr %s1092, 6
        %s1094 = smul.addr %s1093, 8
        %s1095 = scalar_lea.vmem %s8, %s1094
      $region64: #{up_conv2d_forward.7} parent=59 // pred_fallthru
        _
    $region60: #{up_conv2d_forward.7} parent=5 // pred_fallthru
      _
  $region6: #{up_conv2d_forward.7} parent=0 // loop_footer
    %s18 = sadd.s32 1, %s14
  $region7: #{up_conv2d_forward.7} parent=0 // loop_footer_branch
    %13 = sbr.rel target = $region3
  $region8: #{up_conv2d_forward.7} parent=0 // loop_exit
    _

</llo_original>
